<compile_context>
chip_gen: v7x
topology: tpu7x:2x2x1
jax: 0.10.0
libtpu: 0.0.40
codegen_flags: <defaults>
</compile_context>

<pallas_src>
import numpy as np
import jax
import jax.numpy as jnp
from jax.experimental import pallas as pl
from jax.experimental.pallas import tpu as pltpu

# ---------------- config ----------------
B = 2
WIN = (4, 4)
N = WIN[0] * WIN[1] + 1            # 17 tokens (CLS + window)
DIM = 32                           # embed dim C
NUM_HEADS = 4
HEAD_DIM = DIM // NUM_HEADS        # 8
D_ALL = HEAD_DIM * NUM_HEADS       # 32
SCALE = HEAD_DIM ** (-0.5)


# ------------- relative position index (numpy, matches torch impl) -------------
def gen_relative_position_index(window_size):
    Wh, Ww = window_size
    num_relative_distance = (2 * Wh - 1) * (2 * Ww - 1) + 3
    window_area = Wh * Ww
    coords = np.stack(np.meshgrid(np.arange(Wh), np.arange(Ww), indexing="ij"))
    coords_flatten = coords.reshape(2, -1)
    relative_coords = coords_flatten[:, :, None] - coords_flatten[:, None, :]
    relative_coords = relative_coords.transpose(1, 2, 0).copy()
    relative_coords[:, :, 0] += Wh - 1
    relative_coords[:, :, 1] += Ww - 1
    relative_coords[:, :, 0] *= 2 * Ww - 1
    rpi = np.zeros((window_area + 1,) * 2, dtype=relative_coords.dtype)
    rpi[1:, 1:] = relative_coords.sum(-1)
    rpi[0, 0:] = num_relative_distance - 3
    rpi[0:, 0] = num_relative_distance - 2
    rpi[0, 0] = num_relative_distance - 1
    return rpi


# ------------- Pallas kernel: one window / batch element per grid step -------------
def attention_kernel(x_ref, wqkv_ref, bqkv_ref, relb_ref, wproj_ref, bproj_ref, o_ref):
    # x_ref: (N, C) for the current window; parameter refs are VMEM-resident.
    qkv = jnp.dot(x_ref[...], wqkv_ref[...],
                  preferred_element_type=jnp.float32) + bqkv_ref[...]      # (N, 3*D_ALL)

    # Split heads: static 8-lane slices, stacked along a new leading (batch) dim.
    def heads(base):
        return jnp.stack(
            [qkv[:, base + h * HEAD_DIM: base + (h + 1) * HEAD_DIM]
             for h in range(NUM_HEADS)], axis=0)                           # (H, N, hd)

    q = heads(0)               # attention scale already folded into Wq / q_bias
    k = heads(D_ALL)
    v = heads(2 * D_ALL)

    # One batched score matmul over all heads + rel-pos bias; stays in vregs.
    s = jnp.einsum("hnd,hmd->hnm", q, k,
                   preferred_element_type=jnp.float32) + relb_ref[...]     # (H, N, N)
    s = s - jnp.max(s, axis=-1, keepdims=True)
    p = jnp.exp(s)
    l = jnp.sum(p, axis=-1, keepdims=True)                                 # (H, N, 1)
    inv_l = pl.reciprocal(l, approx=True)       # EUP slot (free in the bundle)
    inv_l = inv_l * (2.0 - l * inv_l)           # one Newton step -> ~f32 accuracy

    # Batched PV; normalize the small (H, N, hd) context instead of (H, N, N).
    ctx = jnp.einsum("hnm,hmd->hnd", p, v,
                     preferred_element_type=jnp.float32) * inv_l           # (H, N, hd)

    # Fused output projection: heads concatenated to (N, D_ALL), one depth-32 matmul.
    ctx_all = jnp.concatenate([ctx[h] for h in range(NUM_HEADS)], axis=1)  # (N, D_ALL)
    o_ref[...] = (jnp.dot(ctx_all, wproj_ref[...],
                          preferred_element_type=jnp.float32)
                  + bproj_ref[...]).astype(o_ref.dtype)


def beit_attention(x, w_qkv_scaled, b_qkv_scaled, rel_bias, w_proj, b_proj):
    Bsz, n, c = x.shape
    grid_spec = pltpu.PrefetchScalarGridSpec(
        num_scalar_prefetch=0,
        grid=(Bsz,),
        in_specs=[
            # activations: block advances with the window/batch grid index
            pl.BlockSpec((None, n, c), lambda b: (b, 0, 0)),
            # parameters: constant index_maps -> DMA'd once, VMEM-resident
            pl.BlockSpec(w_qkv_scaled.shape, lambda b: (0, 0)),
            pl.BlockSpec(b_qkv_scaled.shape, lambda b: (0, 0)),
            pl.BlockSpec(rel_bias.shape, lambda b: (0, 0, 0)),
            pl.BlockSpec(w_proj.shape, lambda b: (0, 0)),
            pl.BlockSpec(b_proj.shape, lambda b: (0, 0)),
        ],
        out_specs=pl.BlockSpec((None, n, c), lambda b: (b, 0, 0)),
    )
    return pl.pallas_call(
        attention_kernel,
        out_shape=jax.ShapeDtypeStruct((Bsz, n, c), jnp.float32),
        grid_spec=grid_spec,
        compiler_params=pltpu.CompilerParams(
            dimension_semantics=("parallel",),   # shards windows across v7x's 2 TCs
        ),
    )(x, w_qkv_scaled, b_qkv_scaled, rel_bias, w_proj, b_proj)


# ------------- pure-JAX reference (matches PyTorch forward semantics) -------------
def reference(x, w_qkv, b_qkv, rel_bias, w_proj, b_proj):
    Bsz, n, c = x.shape
    qkv = x @ w_qkv + b_qkv[0]                                    # (B, N, 3*D)
    qkv = qkv.reshape(Bsz, n, 3, NUM_HEADS, HEAD_DIM).transpose(2, 0, 3, 1, 4)
    q, k, v = qkv[0], qkv[1], qkv[2]                              # (B, H, N, hd)
    q = q * SCALE
    attn = jnp.einsum("bhnd,bhmd->bhnm", q, k) + rel_bias[None]   # (B, H, N, N)
    attn = jax.nn.softmax(attn, axis=-1)
    out = jnp.einsum("bhnm,bhmd->bhnd", attn, v)                  # (B, H, N, hd)
    out = out.transpose(0, 2, 1, 3).reshape(Bsz, n, D_ALL)
    return out @ w_proj + b_proj[0]


if __name__ == "__main__":
    key = jax.random.PRNGKey(0)
    k_x, k_wqkv, k_qb, k_vb, k_tab, k_wp, k_bp = jax.random.split(key, 7)

    # input
    x = jax.random.normal(k_x, (B, N, DIM), dtype=jnp.float32)

    # parameters (deterministic synthetic init)
    w_qkv = 0.02 * jax.random.normal(k_wqkv, (DIM, 3 * D_ALL), dtype=jnp.float32)
    q_bias = 0.02 * jax.random.normal(k_qb, (D_ALL,), dtype=jnp.float32)
    k_bias = jnp.zeros((D_ALL,), dtype=jnp.float32)   # registered buffer, always zero
    v_bias = 0.02 * jax.random.normal(k_vb, (D_ALL,), dtype=jnp.float32)
    b_qkv = jnp.concatenate([q_bias, k_bias, v_bias])[None, :]    # (1, 3*D_ALL)

    num_rel_dist = (2 * WIN[0] - 1) * (2 * WIN[1] - 1) + 3
    rel_table = 0.02 * jax.random.normal(k_tab, (num_rel_dist, NUM_HEADS), dtype=jnp.float32)
    rpi = jnp.asarray(gen_relative_position_index(WIN))           # (N, N) int
    # gather + permute is glue (plain JAX, host-side): (H, N, N)
    rel_bias = rel_table[rpi.reshape(-1)].reshape(N, N, NUM_HEADS).transpose(2, 0, 1)

    w_proj = 0.02 * jax.random.normal(k_wp, (D_ALL, DIM), dtype=jnp.float32)
    b_proj = 0.02 * jax.random.normal(k_bp, (1, DIM), dtype=jnp.float32)

    # --- one-time host-side parameter transform for the kernel ---
    # fold attention scale into the Q columns of the QKV projection (+ q bias)
    scale_cols = jnp.concatenate([jnp.full((D_ALL,), SCALE, jnp.float32),
                                  jnp.ones((2 * D_ALL,), jnp.float32)])
    w_qkv_scaled = w_qkv * scale_cols[None, :]
    b_qkv_scaled = b_qkv * scale_cols[None, :]

    out = beit_attention(x, w_qkv_scaled, b_qkv_scaled, rel_bias, w_proj, b_proj)
    out = jax.block_until_ready(out)

    ref = reference(x, w_qkv, b_qkv, rel_bias, w_proj, b_proj)
    assert out.shape == (B, N, DIM)
    np.testing.assert_allclose(np.asarray(out), np.asarray(ref), atol=1e-5, rtol=1e-5)

    print("KERNEL_OK")
</pallas_src>

<mosaic_0001>
module attributes {stable_mosaic.version = 11 : i64} {
  func.func @attention_kernel(%arg0: i32, %arg1: memref<1x17x32xf32, #tpu.memory_space<vmem>>, %arg2: memref<32x96xf32, #tpu.memory_space<vmem>>, %arg3: memref<1x96xf32, #tpu.memory_space<vmem>>, %arg4: memref<4x17x17xf32, #tpu.memory_space<vmem>>, %arg5: memref<32x32xf32, #tpu.memory_space<vmem>>, %arg6: memref<1x32xf32, #tpu.memory_space<vmem>>, %arg7: memref<1x17x32xf32, #tpu.memory_space<vmem>>) attributes {dimension_semantics = [#tpu.dimension_semantics<parallel>], iteration_bounds = array<i64: 2>, scalar_prefetch = 0 : i64, scratch_operands = 0 : i64, tpu.core_type = #tpu.core_type<tc>, window_params = [{transform_indices = @transform_0, window_bounds = array<i64: 1, 17, 32>}, {pipeline_mode = #tpu.pipeline_mode<synchronous>, transform_indices = @transform_1, window_bounds = array<i64: 32, 96>}, {pipeline_mode = #tpu.pipeline_mode<synchronous>, transform_indices = @transform_2, window_bounds = array<i64: 1, 96>}, {pipeline_mode = #tpu.pipeline_mode<synchronous>, transform_indices = @transform_3, window_bounds = array<i64: 4, 17, 17>}, {pipeline_mode = #tpu.pipeline_mode<synchronous>, transform_indices = @transform_4, window_bounds = array<i64: 32, 32>}, {pipeline_mode = #tpu.pipeline_mode<synchronous>, transform_indices = @transform_5, window_bounds = array<i64: 1, 32>}, {transform_indices = @transform_6, window_bounds = array<i64: 1, 17, 32>}]} {
    %c0 = arith.constant 0 : index
    %c0_0 = arith.constant 0 : index
    %c0_1 = arith.constant 0 : index
    %0 = vector.load %arg1[%c0, %c0_0, %c0_1] : memref<1x17x32xf32, #tpu.memory_space<vmem>>, vector<1x17x32xf32>
    %1 = vector.shape_cast %0 : vector<1x17x32xf32> to vector<17x32xf32>
    %c0_2 = arith.constant 0 : index
    %c0_3 = arith.constant 0 : index
    %2 = vector.load %arg2[%c0_2, %c0_3] : memref<32x96xf32, #tpu.memory_space<vmem>>, vector<32x96xf32>
    %cst = arith.constant dense<0.000000e+00> : vector<17x96xf32>
    %3 = tpu.matmul %1, %2, %cst {dimension_numbers = #tpu.dot_dimension_numbers<[1], [0], [0], [1], [0, 0, 1, 1], [], []>} : vector<17x32xf32>, vector<32x96xf32>, vector<17x96xf32> -> vector<17x96xf32>
    %c0_4 = arith.constant 0 : index
    %c0_5 = arith.constant 0 : index
    %4 = vector.load %arg3[%c0_4, %c0_5] : memref<1x96xf32, #tpu.memory_space<vmem>>, vector<1x96xf32>
    %5 = vector.broadcast %4 : vector<1x96xf32> to vector<17x96xf32>
    %6 = arith.addf %3, %5 : vector<17x96xf32>
    %7 = vector.extract_strided_slice %6 {offsets = [0, 0], sizes = [17, 8], strides = [1, 1]} : vector<17x96xf32> to vector<17x8xf32>
    %8 = vector.extract_strided_slice %6 {offsets = [0, 8], sizes = [17, 8], strides = [1, 1]} : vector<17x96xf32> to vector<17x8xf32>
    %9 = vector.extract_strided_slice %6 {offsets = [0, 16], sizes = [17, 8], strides = [1, 1]} : vector<17x96xf32> to vector<17x8xf32>
    %10 = vector.extract_strided_slice %6 {offsets = [0, 24], sizes = [17, 8], strides = [1, 1]} : vector<17x96xf32> to vector<17x8xf32>
    %11 = vector.shape_cast %7 : vector<17x8xf32> to vector<1x17x8xf32>
    %12 = vector.shape_cast %8 : vector<17x8xf32> to vector<1x17x8xf32>
    %13 = vector.shape_cast %9 : vector<17x8xf32> to vector<1x17x8xf32>
    %14 = vector.shape_cast %10 : vector<17x8xf32> to vector<1x17x8xf32>
    %15 = tpu.concatenate %11, %12, %13, %14 in 0 : vector<1x17x8xf32>, vector<1x17x8xf32>, vector<1x17x8xf32>, vector<1x17x8xf32> -> vector<4x17x8xf32>
    %16 = vector.extract_strided_slice %6 {offsets = [0, 32], sizes = [17, 8], strides = [1, 1]} : vector<17x96xf32> to vector<17x8xf32>
    %17 = vector.extract_strided_slice %6 {offsets = [0, 40], sizes = [17, 8], strides = [1, 1]} : vector<17x96xf32> to vector<17x8xf32>
    %18 = vector.extract_strided_slice %6 {offsets = [0, 48], sizes = [17, 8], strides = [1, 1]} : vector<17x96xf32> to vector<17x8xf32>
    %19 = vector.extract_strided_slice %6 {offsets = [0, 56], sizes = [17, 8], strides = [1, 1]} : vector<17x96xf32> to vector<17x8xf32>
    %20 = vector.shape_cast %16 : vector<17x8xf32> to vector<1x17x8xf32>
    %21 = vector.shape_cast %17 : vector<17x8xf32> to vector<1x17x8xf32>
    %22 = vector.shape_cast %18 : vector<17x8xf32> to vector<1x17x8xf32>
    %23 = vector.shape_cast %19 : vector<17x8xf32> to vector<1x17x8xf32>
    %24 = tpu.concatenate %20, %21, %22, %23 in 0 : vector<1x17x8xf32>, vector<1x17x8xf32>, vector<1x17x8xf32>, vector<1x17x8xf32> -> vector<4x17x8xf32>
    %25 = vector.extract_strided_slice %6 {offsets = [0, 64], sizes = [17, 8], strides = [1, 1]} : vector<17x96xf32> to vector<17x8xf32>
    %26 = vector.extract_strided_slice %6 {offsets = [0, 72], sizes = [17, 8], strides = [1, 1]} : vector<17x96xf32> to vector<17x8xf32>
    %27 = vector.extract_strided_slice %6 {offsets = [0, 80], sizes = [17, 8], strides = [1, 1]} : vector<17x96xf32> to vector<17x8xf32>
    %28 = vector.extract_strided_slice %6 {offsets = [0, 88], sizes = [17, 8], strides = [1, 1]} : vector<17x96xf32> to vector<17x8xf32>
    %29 = vector.shape_cast %25 : vector<17x8xf32> to vector<1x17x8xf32>
    %30 = vector.shape_cast %26 : vector<17x8xf32> to vector<1x17x8xf32>
    %31 = vector.shape_cast %27 : vector<17x8xf32> to vector<1x17x8xf32>
    %32 = vector.shape_cast %28 : vector<17x8xf32> to vector<1x17x8xf32>
    %33 = tpu.concatenate %29, %30, %31, %32 in 0 : vector<1x17x8xf32>, vector<1x17x8xf32>, vector<1x17x8xf32>, vector<1x17x8xf32> -> vector<4x17x8xf32>
    "tpu.trace_start"() <{level = 10 : i32, message = "hnd,hmd->hnm"}> : () -> ()
    %cst_6 = arith.constant dense<0.000000e+00> : vector<4x17x17xf32>
    %34 = tpu.matmul %15, %24, %cst_6 {dimension_numbers = #tpu.dot_dimension_numbers<[2], [2], [1], [1], [0, 0, 0, 1, 1, 1], [0], [0]>} : vector<4x17x8xf32>, vector<4x17x8xf32>, vector<4x17x17xf32> -> vector<4x17x17xf32>
    "tpu.trace_stop"() : () -> ()
    %c0_7 = arith.constant 0 : index
    %c0_8 = arith.constant 0 : index
    %c0_9 = arith.constant 0 : index
    %35 = vector.load %arg4[%c0_7, %c0_8, %c0_9] : memref<4x17x17xf32, #tpu.memory_space<vmem>>, vector<4x17x17xf32>
    %36 = arith.addf %34, %35 : vector<4x17x17xf32>
    %cst_10 = arith.constant dense<0xFF800000> : vector<4x17xf32>
    %37 = vector.multi_reduction <maximumf>, %36, %cst_10 [2] : vector<4x17x17xf32> to vector<4x17xf32>
    %38 = vector.shape_cast %37 : vector<4x17xf32> to vector<4x17x1xf32>
    %39 = vector.broadcast %38 : vector<4x17x1xf32> to vector<4x17x17xf32>
    %40 = arith.subf %36, %39 : vector<4x17x17xf32>
    %41 = math.exp %40 : vector<4x17x17xf32>
    %cst_11 = arith.constant dense<0.000000e+00> : vector<4x17xf32>
    %42 = vector.multi_reduction <add>, %41, %cst_11 [2] : vector<4x17x17xf32> to vector<4x17xf32>
    %43 = vector.shape_cast %42 : vector<4x17xf32> to vector<4x17x1xf32>
    %44 = tpu.reciprocal %43 {approx = true} : vector<4x17x1xf32> -> vector<4x17x1xf32>
    %45 = arith.mulf %43, %44 : vector<4x17x1xf32>
    %cst_12 = arith.constant 2.000000e+00 : f32
    %46 = vector.broadcast %cst_12 : f32 to vector<4x17x1xf32>
    %47 = arith.subf %46, %45 : vector<4x17x1xf32>
    %48 = arith.mulf %44, %47 : vector<4x17x1xf32>
    "tpu.trace_start"() <{level = 10 : i32, message = "hnm,hmd->hnd"}> : () -> ()
    %cst_13 = arith.constant dense<0.000000e+00> : vector<4x17x8xf32>
    %49 = tpu.matmul %41, %33, %cst_13 {dimension_numbers = #tpu.dot_dimension_numbers<[2], [1], [1], [2], [0, 0, 0, 1, 1, 2], [0], [0]>} : vector<4x17x17xf32>, vector<4x17x8xf32>, vector<4x17x8xf32> -> vector<4x17x8xf32>
    "tpu.trace_stop"() : () -> ()
    %50 = vector.broadcast %48 : vector<4x17x1xf32> to vector<4x17x8xf32>
    %51 = arith.mulf %49, %50 : vector<4x17x8xf32>
    %52 = vector.extract_strided_slice %51 {offsets = [0, 0, 0], sizes = [1, 17, 8], strides = [1, 1, 1]} : vector<4x17x8xf32> to vector<1x17x8xf32>
    %53 = vector.shape_cast %52 : vector<1x17x8xf32> to vector<17x8xf32>
    %54 = vector.extract_strided_slice %51 {offsets = [1, 0, 0], sizes = [1, 17, 8], strides = [1, 1, 1]} : vector<4x17x8xf32> to vector<1x17x8xf32>
    %55 = vector.shape_cast %54 : vector<1x17x8xf32> to vector<17x8xf32>
    %56 = vector.extract_strided_slice %51 {offsets = [2, 0, 0], sizes = [1, 17, 8], strides = [1, 1, 1]} : vector<4x17x8xf32> to vector<1x17x8xf32>
    %57 = vector.shape_cast %56 : vector<1x17x8xf32> to vector<17x8xf32>
    %58 = vector.extract_strided_slice %51 {offsets = [3, 0, 0], sizes = [1, 17, 8], strides = [1, 1, 1]} : vector<4x17x8xf32> to vector<1x17x8xf32>
    %59 = vector.shape_cast %58 : vector<1x17x8xf32> to vector<17x8xf32>
    %60 = tpu.concatenate %53, %55, %57, %59 in 1 : vector<17x8xf32>, vector<17x8xf32>, vector<17x8xf32>, vector<17x8xf32> -> vector<17x32xf32>
    %c0_14 = arith.constant 0 : index
    %c0_15 = arith.constant 0 : index
    %61 = vector.load %arg5[%c0_14, %c0_15] : memref<32x32xf32, #tpu.memory_space<vmem>>, vector<32x32xf32>
    %cst_16 = arith.constant dense<0.000000e+00> : vector<17x32xf32>
    %62 = tpu.matmul %60, %61, %cst_16 {dimension_numbers = #tpu.dot_dimension_numbers<[1], [0], [0], [1], [0, 0, 1, 1], [], []>} : vector<17x32xf32>, vector<32x32xf32>, vector<17x32xf32> -> vector<17x32xf32>
    %c0_17 = arith.constant 0 : index
    %c0_18 = arith.constant 0 : index
    %63 = vector.load %arg6[%c0_17, %c0_18] : memref<1x32xf32, #tpu.memory_space<vmem>>, vector<1x32xf32>
    %64 = vector.broadcast %63 : vector<1x32xf32> to vector<17x32xf32>
    %65 = arith.addf %62, %64 : vector<17x32xf32>
    %c0_19 = arith.constant 0 : index
    %c0_20 = arith.constant 0 : index
    %c0_21 = arith.constant 0 : index
    %66 = vector.load %arg7[%c0_19, %c0_20, %c0_21] : memref<1x17x32xf32, #tpu.memory_space<vmem>>, vector<1x17x32xf32>
    %67 = vector.shape_cast %66 : vector<1x17x32xf32> to vector<17x32xf32>
    %68 = vector.shape_cast %65 : vector<17x32xf32> to vector<1x17x32xf32>
    tpu.vector_store %arg7[%c0_19, %c0_20, %c0_21], %68 {strides = array<i32>} : memref<1x17x32xf32, #tpu.memory_space<vmem>>, vector<1x17x32xf32>,
    return
  }
  func.func @transform_0(%arg0: i32) -> (i32, i32, i32) {
    %c0_i32 = arith.constant 0 : i32
    %c0_i32_0 = arith.constant 0 : i32
    %c0_i32_1 = arith.constant 0 : i32
    return %arg0, %c0_i32, %c0_i32_0 : i32, i32, i32
  }
  func.func @transform_1(%arg0: i32) -> (i32, i32) {
    %c0_i32 = arith.constant 0 : i32
    %c0_i32_0 = arith.constant 0 : i32
    %c0_i32_1 = arith.constant 0 : i32
    return %c0_i32, %c0_i32_0 : i32, i32
  }
  func.func @transform_2(%arg0: i32) -> (i32, i32) {
    %c0_i32 = arith.constant 0 : i32
    %c0_i32_0 = arith.constant 0 : i32
    %c0_i32_1 = arith.constant 0 : i32
    return %c0_i32, %c0_i32_0 : i32, i32
  }
  func.func @transform_3(%arg0: i32) -> (i32, i32, i32) {
    %c0_i32 = arith.constant 0 : i32
    %c0_i32_0 = arith.constant 0 : i32
    %c0_i32_1 = arith.constant 0 : i32
    %c0_i32_2 = arith.constant 0 : i32
    return %c0_i32, %c0_i32_0, %c0_i32_1 : i32, i32, i32
  }
  func.func @transform_4(%arg0: i32) -> (i32, i32) {
    %c0_i32 = arith.constant 0 : i32
    %c0_i32_0 = arith.constant 0 : i32
    %c0_i32_1 = arith.constant 0 : i32
    return %c0_i32, %c0_i32_0 : i32, i32
  }
  func.func @transform_5(%arg0: i32) -> (i32, i32) {
    %c0_i32 = arith.constant 0 : i32
    %c0_i32_0 = arith.constant 0 : i32
    %c0_i32_1 = arith.constant 0 : i32
    return %c0_i32, %c0_i32_0 : i32, i32
  }
  func.func @transform_6(%arg0: i32) -> (i32, i32, i32) {
    %c0_i32 = arith.constant 0 : i32
    %c0_i32_0 = arith.constant 0 : i32
    %c0_i32_1 = arith.constant 0 : i32
    return %arg0, %c0_i32, %c0_i32_0 : i32, i32, i32
  }
}

</mosaic_0001>

<llo_original>
// kernel: tpu_custom_call.1
$region0: #{tpu_custom_call.1}
  #allocation0 [shape = 'u32[]', space=smem, size = 0x4, offset = 0x4, fixed_abs, tag = 'smem constant byte address 0x4 - core index']
  #allocation1 [shape = 'u32[144,128]{1,0:T(1,128)}', space=vmem, size = 0x12000, scoped, tag = 'internal scratch']
  %s0 = inlined_call_operand.vmem [shape: f32[2,17,32], index: 0, kind: input, shape index: {}]
  %s1 = inlined_call_operand.vmem [shape: f32[32,96], index: 1, kind: input, shape index: {}]
  %s2 = inlined_call_operand.vmem [shape: f32[1,96], index: 2, kind: input, shape index: {}]
  %s3 = inlined_call_operand.vmem [shape: f32[4,17,17], index: 3, kind: input, shape index: {}]
  %s4 = inlined_call_operand.vmem [shape: f32[32,32], index: 4, kind: input, shape index: {}]
  %s5 = inlined_call_operand.vmem [shape: f32[1,32], index: 5, kind: input, shape index: {}]
  %s6 = inlined_call_operand.vmem [shape: f32[2,17,32], index: 6, kind: output, shape index: {}]
  %s7 = sld [smem:[#allocation0]]
  $region57: #{tpu_custom_call.1} parent=0
    _
  %s9 = ssub.s32 1, %s7
  %s10 = scalar_select 0, %s9, %s7
  loop: start=0, step=1, limit=4
  $region2: #{tpu_custom_call.1} parent=0 // loop_pre_header
    _
  $region3: #{tpu_custom_call.1} parent=0 // loop_header
    %s12 = sphi 0, %s16
    %p13 = scmp.ge.s32.totalorder %s12, 4
    %s22 = sphi 0, %s24
    %s25 = sphi 0, %s22
    %s26 = sphi 0, %s25
    %s42 = sphi 0, %s26
    %s46 = sphi 0, %s46
    %s48 = sphi 0, %s46
    %s49 = sphi 0, %s48
    %s63 = sphi 0, %s49
    %s67 = sphi 0, %s67
    %s69 = sphi 0, %s67
    %s70 = sphi 0, %s69
    %s84 = sphi 0, %s70
    %s88 = sphi 0, %s88
    %s90 = sphi 0, %s88
    %s91 = sphi 0, %s90
    %s105 = sphi 0, %s91
    %s109 = sphi 0, %s109
    %s111 = sphi 0, %s109
    %s112 = sphi 0, %s111
    %s126 = sphi 0, %s112
    %s130 = sphi 0, %s130
    %s132 = sphi 0, %s130
    %s133 = sphi 0, %s132
    %s147 = sphi 0, %s133
    %s153 = sphi 0, %s155
    %s156 = sphi 0, %s153
    %s157 = sphi 0, %s156
    %s173 = sphi 0, %s157
  $region4: #{tpu_custom_call.1} parent=0 // loop_header_branch
    %15 = sbr.rel (%p13) target = $region8
  $region5: #{tpu_custom_call.1} parent=0 // loop_body
    %s17 = ssub.s32 %s12, 1
    %s18 = ssub.s32 %s12, 2
    %s19 = sadd.s32 %s12, 1
    %s20 = ssub.s32 %s12, %s19
    %p21 = scmp.eq.s32.totalorder %s20, 0
    %s23 = sadd.s32 %s22, 1
    %s24 = scalar_select %p21, %s22, %s23
    %p27 = pneg %p21
    %p28 = scmp.eq.s32.totalorder %s12, 1
    %p29 = por %p27, %p28
    %p30 = scmp.ne.s32.totalorder %s22, %s25
    %p31 = scmp.eq.s32.totalorder %s12, 0
    %p32 = por %p30, %p31
    %p33 = scmp.ne.s32.totalorder %s22, %s25
    %p34 = scmp.eq.s32.totalorder %s17, 1
    %p35 = por %p33, %p34
    %p36 = scmp.ne.s32.totalorder %s25, %s26
    %p37 = scmp.eq.s32.totalorder %s17, 0
    %p38 = por %p36, %p37
    %p39 = scmp.ne.s32.totalorder %s25, %s26
    %p40 = scmp.eq.s32.totalorder %s18, 1
    %p41 = por %p39, %p40
    %p43 = scmp.ne.s32.totalorder %s26, %s42
    %p44 = scmp.eq.s32.totalorder %s18, 0
    %p45 = por %p43, %p44
    %s47 = sadd.s32 %s46, 1
    %p50 = scmp.eq.s32.totalorder %s12, 1
    %p51 = scmp.ne.s32.totalorder %s46, %s48
    %p52 = scmp.eq.s32.totalorder %s12, 0
    %p53 = por %p51, %p52
    %p54 = scmp.ne.s32.totalorder %s46, %s48
    %p55 = scmp.eq.s32.totalorder %s17, 1
    %p56 = por %p54, %p55
    %p57 = scmp.ne.s32.totalorder %s48, %s49
    %p58 = scmp.eq.s32.totalorder %s17, 0
    %p59 = por %p57, %p58
    %p60 = scmp.ne.s32.totalorder %s48, %s49
    %p61 = scmp.eq.s32.totalorder %s18, 1
    %p62 = por %p60, %p61
    %p64 = scmp.ne.s32.totalorder %s49, %s63
    %p65 = scmp.eq.s32.totalorder %s18, 0
    %p66 = por %p64, %p65
    %s68 = sadd.s32 %s67, 1
    %p71 = scmp.eq.s32.totalorder %s12, 1
    %p72 = scmp.ne.s32.totalorder %s67, %s69
    %p73 = scmp.eq.s32.totalorder %s12, 0
    %p74 = por %p72, %p73
    %p75 = scmp.ne.s32.totalorder %s67, %s69
    %p76 = scmp.eq.s32.totalorder %s17, 1
    %p77 = por %p75, %p76
    %p78 = scmp.ne.s32.totalorder %s69, %s70
    %p79 = scmp.eq.s32.totalorder %s17, 0
    %p80 = por %p78, %p79
    %p81 = scmp.ne.s32.totalorder %s69, %s70
    %p82 = scmp.eq.s32.totalorder %s18, 1
    %p83 = por %p81, %p82
    %p85 = scmp.ne.s32.totalorder %s70, %s84
    %p86 = scmp.eq.s32.totalorder %s18, 0
    %p87 = por %p85, %p86
    %s89 = sadd.s32 %s88, 1
    %p92 = scmp.eq.s32.totalorder %s12, 1
    %p93 = scmp.ne.s32.totalorder %s88, %s90
    %p94 = scmp.eq.s32.totalorder %s12, 0
    %p95 = por %p93, %p94
    %p96 = scmp.ne.s32.totalorder %s88, %s90
    %p97 = scmp.eq.s32.totalorder %s17, 1
    %p98 = por %p96, %p97
    %p99 = scmp.ne.s32.totalorder %s90, %s91
    %p100 = scmp.eq.s32.totalorder %s17, 0
    %p101 = por %p99, %p100
    %p102 = scmp.ne.s32.totalorder %s90, %s91
    %p103 = scmp.eq.s32.totalorder %s18, 1
    %p104 = por %p102, %p103
    %p106 = scmp.ne.s32.totalorder %s91, %s105
    %p107 = scmp.eq.s32.totalorder %s18, 0
    %p108 = por %p106, %p107
    %s110 = sadd.s32 %s109, 1
    %p113 = scmp.eq.s32.totalorder %s12, 1
    %p114 = scmp.ne.s32.totalorder %s109, %s111
    %p115 = scmp.eq.s32.totalorder %s12, 0
    %p116 = por %p114, %p115
    %p117 = scmp.ne.s32.totalorder %s109, %s111
    %p118 = scmp.eq.s32.totalorder %s17, 1
    %p119 = por %p117, %p118
    %p120 = scmp.ne.s32.totalorder %s111, %s112
    %p121 = scmp.eq.s32.totalorder %s17, 0
    %p122 = por %p120, %p121
    %p123 = scmp.ne.s32.totalorder %s111, %s112
    %p124 = scmp.eq.s32.totalorder %s18, 1
    %p125 = por %p123, %p124
    %p127 = scmp.ne.s32.totalorder %s112, %s126
    %p128 = scmp.eq.s32.totalorder %s18, 0
    %p129 = por %p127, %p128
    %s131 = sadd.s32 %s130, 1
    %p134 = scmp.eq.s32.totalorder %s12, 1
    %p135 = scmp.ne.s32.totalorder %s130, %s132
    %p136 = scmp.eq.s32.totalorder %s12, 0
    %p137 = por %p135, %p136
    %p138 = scmp.ne.s32.totalorder %s130, %s132
    %p139 = scmp.eq.s32.totalorder %s17, 1
    %p140 = por %p138, %p139
    %p141 = scmp.ne.s32.totalorder %s132, %s133
    %p142 = scmp.eq.s32.totalorder %s17, 0
    %p143 = por %p141, %p142
    %p144 = scmp.ne.s32.totalorder %s132, %s133
    %p145 = scmp.eq.s32.totalorder %s18, 1
    %p146 = por %p144, %p145
    %p148 = scmp.ne.s32.totalorder %s133, %s147
    %p149 = scmp.eq.s32.totalorder %s18, 0
    %p150 = por %p148, %p149
    %s151 = ssub.s32 %s12, %s19
    %p152 = scmp.eq.s32.totalorder %s151, 0
    %s154 = sadd.s32 %s153, 1
    %s155 = scalar_select %p152, %s153, %s154
    %p158 = pneg %p152
    %p159 = scmp.eq.s32.totalorder %s12, 1
    %p160 = por %p158, %p159
    %p161 = scmp.ne.s32.totalorder %s153, %s156
    %p162 = scmp.eq.s32.totalorder %s12, 0
    %p163 = por %p161, %p162
    %p164 = scmp.ne.s32.totalorder %s153, %s156
    %p165 = scmp.eq.s32.totalorder %s17, 1
    %p166 = por %p164, %p165
    %p167 = scmp.ne.s32.totalorder %s156, %s157
    %p168 = scmp.eq.s32.totalorder %s17, 0
    %p169 = por %p167, %p168
    %p170 = scmp.ne.s32.totalorder %s156, %s157
    %p171 = scmp.eq.s32.totalorder %s18, 1
    %p172 = por %p170, %p171
    %p174 = scmp.ne.s32.totalorder %s157, %s173
    %p175 = scmp.eq.s32.totalorder %s18, 0
    %p176 = por %p174, %p175
    %p177 = scmp.le.s32.totalorder 1, %s12
    %p178 = scmp.lt.s32.totalorder %s12, 3
    %p179 = pnand %p177, %p178
    %p180 = pneg %p179
    // Predicated region
    $region9: #{tpu_custom_call.1} parent=5 // pred_check
      _
    $region10: #{tpu_custom_call.1} parent=5 // pred_check_branch
      %182 = sbr.rel (%p179) target = $region12
    $region11: #{tpu_custom_call.1} parent=5 // pred_region
      %s183 = ssub.s32 %s12, 1
      // Predicated region
      $region13: #{tpu_custom_call.1} parent=11 // pred_check
        %p184 = pneg %p59
      $region14: #{tpu_custom_call.1} parent=11 // pred_check_branch
        %186 = sbr.rel (%p184) target = $region16
      $region15: #{tpu_custom_call.1} parent=11 // pred_region
        _
      $region16: #{tpu_custom_call.1} parent=11 // pred_fallthru
        _
      // Predicated region
      $region17: #{tpu_custom_call.1} parent=11 // pred_check
        %p187 = pneg %p80
      $region18: #{tpu_custom_call.1} parent=11 // pred_check_branch
        %189 = sbr.rel (%p187) target = $region20
      $region19: #{tpu_custom_call.1} parent=11 // pred_region
        _
      $region20: #{tpu_custom_call.1} parent=11 // pred_fallthru
        _
      // Predicated region
      $region21: #{tpu_custom_call.1} parent=11 // pred_check
        %p190 = pneg %p101
      $region22: #{tpu_custom_call.1} parent=11 // pred_check_branch
        %192 = sbr.rel (%p190) target = $region24
      $region23: #{tpu_custom_call.1} parent=11 // pred_region
        _
      $region24: #{tpu_custom_call.1} parent=11 // pred_fallthru
        _
      // Predicated region
      $region25: #{tpu_custom_call.1} parent=11 // pred_check
        %p193 = pneg %p122
      $region26: #{tpu_custom_call.1} parent=11 // pred_check_branch
        %195 = sbr.rel (%p193) target = $region28
      $region27: #{tpu_custom_call.1} parent=11 // pred_region
        _
      $region28: #{tpu_custom_call.1} parent=11 // pred_fallthru
        _
      // Predicated region
      $region29: #{tpu_custom_call.1} parent=11 // pred_check
        %p196 = pneg %p143
      $region30: #{tpu_custom_call.1} parent=11 // pred_check_branch
        %198 = sbr.rel (%p196) target = $region32
      $region31: #{tpu_custom_call.1} parent=11 // pred_region
        _
      $region32: #{tpu_custom_call.1} parent=11 // pred_fallthru
        _
    $region12: #{tpu_custom_call.1} parent=5 // pred_fallthru
      _
    %p199 = scmp.lt.s32.totalorder %s12, 2
    // Predicated region
    $region33: #{tpu_custom_call.1} parent=5 // pred_check
      %p200 = pneg %p199
    $region34: #{tpu_custom_call.1} parent=5 // pred_check_branch
      %202 = sbr.rel (%p200) target = $region36
    $region35: #{tpu_custom_call.1} parent=5 // pred_region
      // Predicated region
      $region37: #{tpu_custom_call.1} parent=35 // pred_check
        %p203 = pneg %p32
      $region38: #{tpu_custom_call.1} parent=35 // pred_check_branch
        %205 = sbr.rel (%p203) target = $region40
      $region39: #{tpu_custom_call.1} parent=35 // pred_region
        %p206 = scmp.lt.s32.totalorder %s12, 1
        %s207 = scalar_select %p206, %s12, 1
        %s208 = smul.addr %s207, 3
        %s209 = smul.addr %s208, 8
        %s210 = scalar_lea.vmem %s0, %s209
      $region40: #{tpu_custom_call.1} parent=35 // pred_fallthru
        _
    $region36: #{tpu_custom_call.1} parent=5 // pred_fallthru
      _
    %p211 = scmp.le.s32.totalorder 1, %s12
    %p212 = scmp.lt.s32.totalorder %s12, 3
    %p213 = pnand %p211, %p212
    %p214 = pneg %p213
    // Predicated region
    $region41: #{tpu_custom_call.1} parent=5 // pred_check
      _
    $region42: #{tpu_custom_call.1} parent=5 // pred_check_branch
      %216 = sbr.rel (%p213) target = $region44
    $region43: #{tpu_custom_call.1} parent=5 // pred_region
      %s217 = ssub.s32 %s12, 1
      %p218 = scmp.lt.s32.totalorder %s17, 1
      %s219 = scalar_select %p218, %s17, 1
      %s220 = smul.addr %s219, 3
      %s221 = smul.addr %s220, 8
      %s222 = scalar_lea.vmem %s0, %s221
      %p223 = pneg %p38
      %p224 = pneg %p35
      %p225 = pneg %p59
      %p226 = pneg %p56
      %p227 = pneg %p80
      %p228 = pneg %p77
      %p229 = pneg %p101
      %p230 = pneg %p98
      %p231 = pneg %p122
      %p232 = pneg %p119
      %p233 = pneg %p143
      %p234 = pneg %p140
      %p235 = pneg %p169
      %p236 = pneg %p166
      %p237 = scmp.lt.s32.totalorder %s17, 1
      %s238 = scalar_select %p237, %s17, 1
      %s239 = smul.addr %s238, 3
      %s240 = smul.addr %s239, 8
      %s241 = scalar_lea.vmem %s6, %s240
      %p242 = scmp.lt.s32.totalorder %s17, 1
      %s243 = scalar_select %p242, %s17, 1
      %s244 = smul.addr %s243, 3
      %s245 = smul.addr %s244, 8
      %s246 = scalar_lea.vmem %s0, %s245
      %p247 = scmp.lt.s32.totalorder %s17, 1
      %s248 = scalar_select %p247, %s17, 1
      %s249 = smul.addr %s248, 3
      %s250 = smul.addr %s249, 8
      %s251 = scalar_lea.vmem %s6, %s250
      %v252 = vld [vmem:[%s246] sm:$0xff]
      %v253 = vld [vmem:[%s246 + $0x8] sm:$0xff]
      %v254 = vld [vmem:[%s246 + $0x10] sm:$0x1]
      %v255 = vld [vmem:[%s1] sm:$0xff]
      %v256 = vld [vmem:[%s1 + $0x8] sm:$0xff]
      %v257 = vld [vmem:[%s1 + $0x10] sm:$0xff]
      %v258 = vld [vmem:[%s1 + $0x18] sm:$0xff]
      %v259 = vld [vmem:[%s2] sm:$0x1]
      %v261 = vlaneseq
      %v262 = vshrl.u32 %v261, 7
      %v263 = vsub.s32 0, %v262
      %v264 = vrot.slane %v259, %v263
      %vm266 = vcmask 261120
      %v268 = vsel %vm266, %v252, 0
      %v271 = vsel %vm266, %v253, 0
      %v274 = vsel %vm266, %v254, 0
      %276 = vmatprep.subr.mxu0 0.0
      %277 = vmatpush1.msra.mxu0 %v255
      %278 = vmatprep.subr.mxu0 0.0
      %279 = vmatpush1.msra.mxu0 %v256
      %280 = vmatprep.subr.mxu0 0.0
      %281 = vmatpush1.msra.mxu0 %v257
      %282 = vmatprep.subr.mxu0 0.0
      %283 = vmatpush1.msra.mxu0 %v258
      %284 = vmatprep.subr.mxu0 0.0
      %285 = vmatpush1.msra.mxu0 0.0
      %286 = vmatprep.subr.mxu0 0.0
      %287 = vmatpush1.msra.mxu0 0.0
      %288 = vmatprep.subr.mxu0 0.0
      %289 = vmatpush1.msra.mxu0 0.0
      %290 = vmatprep.subr.mxu0 0.0
      %291 = vmatpush1.msra.mxu0 0.0
      %292 = vmatprep.subr.mxu0 0.0
      %293 = vmatpush1.msra.mxu0 0.0
      %294 = vmatprep.subr.mxu0 0.0
      %295 = vmatpush1.msra.mxu0 0.0
      %296 = vmatprep.subr.mxu0 0.0
      %297 = vmatpush1.msra.mxu0 0.0
      %298 = vmatprep.subr.mxu0 0.0
      %299 = vmatpush1.msra.mxu0 0.0
      %300 = vmatprep.subr.mxu0 0.0
      %301 = vmatpush1.msra.mxu0 0.0
      %302 = vmatprep.subr.mxu0 0.0
      %303 = vmatpush1.msra.mxu0 0.0
      %304 = vmatprep.subr.mxu0 0.0
      %305 = vmatpush1.msra.mxu0 0.0
      %306 = vmatprep.subr.mxu0 0.0
      %307 = vmatpush1.msra.mxu0 0.0
      %308 = vmatprep.subr.mxu0 0.0
      %309 = vmatpush1.msra.mxu0 0.0
      %310 = vmatprep.subr.mxu0 0.0
      %311 = vmatpush1.msra.mxu0 0.0
      %312 = vmatprep.subr.mxu0 0.0
      %313 = vmatpush1.msra.mxu0 0.0
      %314 = vmatprep.subr.mxu0 0.0
      %315 = vmatpush1.msra.mxu0 0.0
      %316 = vmatprep.subr.mxu0 0.0
      %317 = vmatpush1.msra.mxu0 0.0
      %318 = vmatprep.subr.mxu0 0.0
      %319 = vmatpush1.msra.mxu0 0.0
      %320 = vmatprep.subr.mxu0 0.0
      %321 = vmatpush1.msra.mxu0 0.0
      %322 = vmatprep.subr.mxu0 0.0
      %323 = vmatpush1.msra.mxu0 0.0
      %324 = vmatprep.subr.mxu0 0.0
      %325 = vmatpush1.msra.mxu0 0.0
      %326 = vmatprep.subr.mxu0 0.0
      %327 = vmatpush1.msra.mxu0 0.0
      %328 = vmatprep.subr.mxu0 0.0
      %329 = vmatpush1.msra.mxu0 0.0
      %330 = vmatprep.subr.mxu0 0.0
      %331 = vmatpush1.msra.mxu0 0.0
      %332 = vmatprep.subr.mxu0 0.0
      %333 = vmatpush1.msra.mxu0 0.0
      %334 = vmatprep.subr.mxu0 0.0
      %335 = vmatpush1.msra.mxu0 0.0
      %336 = vmatprep.subr.mxu0 0.0
      %337 = vmatpush1.msra.mxu0 0.0
      %338 = vmatprep.subr.mxu0 0.0
      %339 = vmatpush1.msra.mxu0 0.0
      %340 = vmatprep.mubr.f32.mxu0 0.0
      %341 = vmatmul.mubr.f32.gmra.mrb[0].mxu0 %v268
      %v342 = vpop.f32.mrb[0].mxu0
      %v343 = vadd.f32 %v264, %v342
      %v344 = vpop.f32.mrb[0].mxu0
      %345 = vmatprep.mubr.f32.mxu0 0.0
      %346 = vmatmul.mubr.f32.gmra.mrb[0].mxu0 %v271
      %v347 = vpop.f32.mrb[0].mxu0
      %v348 = vadd.f32 %v264, %v347
      %v349 = vpop.f32.mrb[0].mxu0
      %350 = vmatprep.mubr.f32.mxu0 0.0
      %351 = vmatmul.mubr.f32.gmra.mrb[0].mxu0 %v274
      %v352 = vpop.f32.mrb[0].mxu0
      %v353 = vadd.f32 %v264, %v352
      %v354 = vpop.f32.mrb[0].mxu0
      %355 = vdwg.mxu0
      %359 = vrot.lane.b32.xlu0 %v343, 120
      %v360 = vpop.permute.xlu0 %359
      %361 = vrot.lane.b32.xlu0 %v348, 120
      %v362 = vpop.permute.xlu0 %361
      %363 = vrot.lane.b32.xlu0 %v353, 120
      %v364 = vpop.permute.xlu0 %363
      %365 = vrot.lane.b32.xlu0 %v343, 112
      %v366 = vpop.permute.xlu0 %365
      %367 = vrot.lane.b32.xlu0 %v348, 112
      %v368 = vpop.permute.xlu0 %367
      %369 = vrot.lane.b32.xlu0 %v353, 112
      %v370 = vpop.permute.xlu0 %369
      %371 = vrot.lane.b32.xlu0 %v343, 104
      %v372 = vpop.permute.xlu0 %371
      %373 = vrot.lane.b32.xlu0 %v348, 104
      %v374 = vpop.permute.xlu0 %373
      %375 = vrot.lane.b32.xlu0 %v353, 104
      %v376 = vpop.permute.xlu0 %375
      %v377 = vld [vmem:[%s3] sm:$0xff]
      %v378 = vld [vmem:[%s3 + $0x8] sm:$0xff]
      %v379 = vld [vmem:[%s3 + $0x10] sm:$0x1]
      %v380 = vld [vmem:[%s3 + $0x18] sm:$0xff]
      %v381 = vld [vmem:[%s3 + $0x20] sm:$0xff]
      %v382 = vld [vmem:[%s3 + $0x28] sm:$0x1]
      %v383 = vld [vmem:[%s3 + $0x30] sm:$0xff]
      %v384 = vld [vmem:[%s3 + $0x38] sm:$0xff]
      %v385 = vld [vmem:[%s3 + $0x40] sm:$0x1]
      %v386 = vld [vmem:[%s3 + $0x48] sm:$0xff]
      %v387 = vld [vmem:[%s3 + $0x50] sm:$0xff]
      %v388 = vld [vmem:[%s3 + $0x58] sm:$0x1]
      %389 = vrot.lane.b32.xlu0 %v343, 96
      %v390 = vpop.permute.xlu0 %389
      %391 = vrot.lane.b32.xlu0 %v348, 96
      %v392 = vpop.permute.xlu0 %391
      %393 = vrot.lane.b32.xlu0 %v353, 96
      %v394 = vpop.permute.xlu0 %393
      %vm395 = vcmask 64512
      %v396 = vsel %vm395, %v343, 0
      %v398 = vsel %vm395, %v348, 0
      %v400 = vsel %vm395, %v353, 0
      %v402 = vsel %vm395, %v390, 0
      %v404 = vsel %vm395, %v392, 0
      %v406 = vsel %vm395, %v394, 0
      %408 = vmatprep.subr.mxu0 0.0
      %409 = vmatpush1.xpose.msra.mxu0 %v402
      %410 = vmatprep.subr.mxu0 0.0
      %411 = vmatpush1.xpose.msra.mxu0 %v404
      %412 = vmatprep.subr.mxu0 0.0
      %413 = vmatpush1.xpose.msra.mxu0 %v406
      %414 = vmatprep.subr.mxu0 0.0
      %415 = vmatpush1.xpose.msra.mxu0 0.0
      %416 = vmatprep.subr.mxu0 0.0
      %417 = vmatpush1.xpose.msra.mxu0 0.0
      %418 = vmatprep.subr.mxu0 0.0
      %419 = vmatpush1.xpose.msra.mxu0 0.0
      %420 = vmatprep.subr.mxu0 0.0
      %421 = vmatpush1.xpose.msra.mxu0 0.0
      %422 = vmatprep.subr.mxu0 0.0
      %423 = vmatpush1.xpose.msra.mxu0 0.0
      %424 = vmatprep.subr.mxu0 0.0
      %425 = vmatpush1.xpose.msra.mxu0 0.0
      %426 = vmatprep.subr.mxu0 0.0
      %427 = vmatpush1.xpose.msra.mxu0 0.0
      %428 = vmatprep.subr.mxu0 0.0
      %429 = vmatpush1.xpose.msra.mxu0 0.0
      %430 = vmatprep.subr.mxu0 0.0
      %431 = vmatpush1.xpose.msra.mxu0 0.0
      %432 = vmatprep.subr.mxu0 0.0
      %433 = vmatpush1.xpose.msra.mxu0 0.0
      %434 = vmatprep.subr.mxu0 0.0
      %435 = vmatpush1.xpose.msra.mxu0 0.0
      %436 = vmatprep.subr.mxu0 0.0
      %437 = vmatpush1.xpose.msra.mxu0 0.0
      %438 = vmatprep.subr.mxu0 0.0
      %439 = vmatpush1.xpose.msra.mxu0 0.0
      %440 = vmatprep.subr.mxu0 0.0
      %441 = vmatpush1.xpose.msra.mxu0 0.0
      %442 = vmatprep.subr.mxu0 0.0
      %443 = vmatpush1.xpose.msra.mxu0 0.0
      %444 = vmatprep.subr.mxu0 0.0
      %445 = vmatpush1.xpose.msra.mxu0 0.0
      %446 = vmatprep.subr.mxu0 0.0
      %447 = vmatpush1.xpose.msra.mxu0 0.0
      %448 = vmatprep.subr.mxu0 0.0
      %449 = vmatpush1.xpose.msra.mxu0 0.0
      %450 = vmatprep.subr.mxu0 0.0
      %451 = vmatpush1.xpose.msra.mxu0 0.0
      %452 = vmatprep.subr.mxu0 0.0
      %453 = vmatpush1.xpose.msra.mxu0 0.0
      %454 = vmatprep.subr.mxu0 0.0
      %455 = vmatpush1.xpose.msra.mxu0 0.0
      %456 = vmatprep.subr.mxu0 0.0
      %457 = vmatpush1.xpose.msra.mxu0 0.0
      %458 = vmatprep.subr.mxu0 0.0
      %459 = vmatpush1.xpose.msra.mxu0 0.0
      %460 = vmatprep.subr.mxu0 0.0
      %461 = vmatpush1.xpose.msra.mxu0 0.0
      %462 = vmatprep.subr.mxu0 0.0
      %463 = vmatpush1.xpose.msra.mxu0 0.0
      %464 = vmatprep.subr.mxu0 0.0
      %465 = vmatpush1.xpose.msra.mxu0 0.0
      %466 = vmatprep.subr.mxu0 0.0
      %467 = vmatpush1.xpose.msra.mxu0 0.0
      %468 = vmatprep.subr.mxu0 0.0
      %469 = vmatpush1.xpose.msra.mxu0 0.0
      %470 = vmatprep.subr.mxu0 0.0
      %471 = vmatpush1.xpose.msra.mxu0 0.0
      %472 = vmatprep.mubr.f32.mxu0 0.0
      %473 = vmatmul.mubr.f32.gmra.mrb[0].mxu0 %v396
      %v474 = vpop.f32.mrb[0].mxu0
      %v475 = vadd.f32 %v377, %v474
      %v476 = vpop.f32.mrb[0].mxu0
      %477 = vmatprep.mubr.f32.mxu0 0.0
      %478 = vmatmul.mubr.f32.gmra.mrb[0].mxu0 %v398
      %v479 = vpop.f32.mrb[0].mxu0
      %v480 = vadd.f32 %v378, %v479
      %v481 = vpop.f32.mrb[0].mxu0
      %482 = vmatprep.mubr.f32.mxu0 0.0
      %483 = vmatmul.mubr.f32.gmra.mrb[0].mxu0 %v400
      %v484 = vpop.f32.mrb[0].mxu0
      %v485 = vadd.f32 %v379, %v484
      %v486 = vpop.f32.mrb[0].mxu0
      %487 = vdwg.mxu0
      %488 = vrot.lane.b32.xlu0 %v360, 96
      %v489 = vpop.permute.xlu0 %488
      %490 = vrot.lane.b32.xlu0 %v362, 96
      %v491 = vpop.permute.xlu0 %490
      %492 = vrot.lane.b32.xlu0 %v364, 96
      %v493 = vpop.permute.xlu0 %492
      %v494 = vsel %vm395, %v360, 0
      %v496 = vsel %vm395, %v362, 0
      %v498 = vsel %vm395, %v364, 0
      %v500 = vsel %vm395, %v489, 0
      %v502 = vsel %vm395, %v491, 0
      %v504 = vsel %vm395, %v493, 0
      %506 = vmatprep.subr.mxu0 0.0
      %507 = vmatpush1.xpose.msra.mxu0 %v500
      %508 = vmatprep.subr.mxu0 0.0
      %509 = vmatpush1.xpose.msra.mxu0 %v502
      %510 = vmatprep.subr.mxu0 0.0
      %511 = vmatpush1.xpose.msra.mxu0 %v504
      %512 = vmatprep.subr.mxu0 0.0
      %513 = vmatpush1.xpose.msra.mxu0 0.0
      %514 = vmatprep.subr.mxu0 0.0
      %515 = vmatpush1.xpose.msra.mxu0 0.0
      %516 = vmatprep.subr.mxu0 0.0
      %517 = vmatpush1.xpose.msra.mxu0 0.0
      %518 = vmatprep.subr.mxu0 0.0
      %519 = vmatpush1.xpose.msra.mxu0 0.0
      %520 = vmatprep.subr.mxu0 0.0
      %521 = vmatpush1.xpose.msra.mxu0 0.0
      %522 = vmatprep.subr.mxu0 0.0
      %523 = vmatpush1.xpose.msra.mxu0 0.0
      %524 = vmatprep.subr.mxu0 0.0
      %525 = vmatpush1.xpose.msra.mxu0 0.0
      %526 = vmatprep.subr.mxu0 0.0
      %527 = vmatpush1.xpose.msra.mxu0 0.0
      %528 = vmatprep.subr.mxu0 0.0
      %529 = vmatpush1.xpose.msra.mxu0 0.0
      %530 = vmatprep.subr.mxu0 0.0
      %531 = vmatpush1.xpose.msra.mxu0 0.0
      %532 = vmatprep.subr.mxu0 0.0
      %533 = vmatpush1.xpose.msra.mxu0 0.0
      %534 = vmatprep.subr.mxu0 0.0
      %535 = vmatpush1.xpose.msra.mxu0 0.0
      %536 = vmatprep.subr.mxu0 0.0
      %537 = vmatpush1.xpose.msra.mxu0 0.0
      %538 = vmatprep.subr.mxu0 0.0
      %539 = vmatpush1.xpose.msra.mxu0 0.0
      %540 = vmatprep.subr.mxu0 0.0
      %541 = vmatpush1.xpose.msra.mxu0 0.0
      %542 = vmatprep.subr.mxu0 0.0
      %543 = vmatpush1.xpose.msra.mxu0 0.0
      %544 = vmatprep.subr.mxu0 0.0
      %545 = vmatpush1.xpose.msra.mxu0 0.0
      %546 = vmatprep.subr.mxu0 0.0
      %547 = vmatpush1.xpose.msra.mxu0 0.0
      %548 = vmatprep.subr.mxu0 0.0
      %549 = vmatpush1.xpose.msra.mxu0 0.0
      %550 = vmatprep.subr.mxu0 0.0
      %551 = vmatpush1.xpose.msra.mxu0 0.0
      %552 = vmatprep.subr.mxu0 0.0
      %553 = vmatpush1.xpose.msra.mxu0 0.0
      %554 = vmatprep.subr.mxu0 0.0
      %555 = vmatpush1.xpose.msra.mxu0 0.0
      %556 = vmatprep.subr.mxu0 0.0
      %557 = vmatpush1.xpose.msra.mxu0 0.0
      %558 = vmatprep.subr.mxu0 0.0
      %559 = vmatpush1.xpose.msra.mxu0 0.0
      %560 = vmatprep.subr.mxu0 0.0
      %561 = vmatpush1.xpose.msra.mxu0 0.0
      %562 = vmatprep.subr.mxu0 0.0
      %563 = vmatpush1.xpose.msra.mxu0 0.0
      %564 = vmatprep.subr.mxu0 0.0
      %565 = vmatpush1.xpose.msra.mxu0 0.0
      %566 = vmatprep.subr.mxu0 0.0
      %567 = vmatpush1.xpose.msra.mxu0 0.0
      %568 = vmatprep.subr.mxu0 0.0
      %569 = vmatpush1.xpose.msra.mxu0 0.0
      %570 = vmatprep.mubr.f32.mxu0 0.0
      %571 = vmatmul.mubr.f32.gmra.mrb[0].mxu0 %v494
      %v572 = vpop.f32.mrb[0].mxu0
      %v573 = vadd.f32 %v380, %v572
      %v574 = vpop.f32.mrb[0].mxu0
      %575 = vmatprep.mubr.f32.mxu0 0.0
      %576 = vmatmul.mubr.f32.gmra.mrb[0].mxu0 %v496
      %v577 = vpop.f32.mrb[0].mxu0
      %v578 = vadd.f32 %v381, %v577
      %v579 = vpop.f32.mrb[0].mxu0
      %580 = vmatprep.mubr.f32.mxu0 0.0
      %581 = vmatmul.mubr.f32.gmra.mrb[0].mxu0 %v498
      %v582 = vpop.f32.mrb[0].mxu0
      %v583 = vadd.f32 %v382, %v582
      %v584 = vpop.f32.mrb[0].mxu0
      %585 = vdwg.mxu0
      %586 = vrot.lane.b32.xlu0 %v366, 96
      %v587 = vpop.permute.xlu0 %586
      %588 = vrot.lane.b32.xlu0 %v368, 96
      %v589 = vpop.permute.xlu0 %588
      %590 = vrot.lane.b32.xlu0 %v370, 96
      %v591 = vpop.permute.xlu0 %590
      %v592 = vsel %vm395, %v366, 0
      %v594 = vsel %vm395, %v368, 0
      %v596 = vsel %vm395, %v370, 0
      %v598 = vsel %vm395, %v587, 0
      %v600 = vsel %vm395, %v589, 0
      %v602 = vsel %vm395, %v591, 0
      %604 = vmatprep.subr.mxu0 0.0
      %605 = vmatpush1.xpose.msra.mxu0 %v598
      %606 = vmatprep.subr.mxu0 0.0
      %607 = vmatpush1.xpose.msra.mxu0 %v600
      %608 = vmatprep.subr.mxu0 0.0
      %609 = vmatpush1.xpose.msra.mxu0 %v602
      %610 = vmatprep.subr.mxu0 0.0
      %611 = vmatpush1.xpose.msra.mxu0 0.0
      %612 = vmatprep.subr.mxu0 0.0
      %613 = vmatpush1.xpose.msra.mxu0 0.0
      %614 = vmatprep.subr.mxu0 0.0
      %615 = vmatpush1.xpose.msra.mxu0 0.0
      %616 = vmatprep.subr.mxu0 0.0
      %617 = vmatpush1.xpose.msra.mxu0 0.0
      %618 = vmatprep.subr.mxu0 0.0
      %619 = vmatpush1.xpose.msra.mxu0 0.0
      %620 = vmatprep.subr.mxu0 0.0
      %621 = vmatpush1.xpose.msra.mxu0 0.0
      %622 = vmatprep.subr.mxu0 0.0
      %623 = vmatpush1.xpose.msra.mxu0 0.0
      %624 = vmatprep.subr.mxu0 0.0
      %625 = vmatpush1.xpose.msra.mxu0 0.0
      %626 = vmatprep.subr.mxu0 0.0
      %627 = vmatpush1.xpose.msra.mxu0 0.0
      %628 = vmatprep.subr.mxu0 0.0
      %629 = vmatpush1.xpose.msra.mxu0 0.0
      %630 = vmatprep.subr.mxu0 0.0
      %631 = vmatpush1.xpose.msra.mxu0 0.0
      %632 = vmatprep.subr.mxu0 0.0
      %633 = vmatpush1.xpose.msra.mxu0 0.0
      %634 = vmatprep.subr.mxu0 0.0
      %635 = vmatpush1.xpose.msra.mxu0 0.0
      %636 = vmatprep.subr.mxu0 0.0
      %637 = vmatpush1.xpose.msra.mxu0 0.0
      %638 = vmatprep.subr.mxu0 0.0
      %639 = vmatpush1.xpose.msra.mxu0 0.0
      %640 = vmatprep.subr.mxu0 0.0
      %641 = vmatpush1.xpose.msra.mxu0 0.0
      %642 = vmatprep.subr.mxu0 0.0
      %643 = vmatpush1.xpose.msra.mxu0 0.0
      %644 = vmatprep.subr.mxu0 0.0
      %645 = vmatpush1.xpose.msra.mxu0 0.0
      %646 = vmatprep.subr.mxu0 0.0
      %647 = vmatpush1.xpose.msra.mxu0 0.0
      %648 = vmatprep.subr.mxu0 0.0
      %649 = vmatpush1.xpose.msra.mxu0 0.0
      %650 = vmatprep.subr.mxu0 0.0
      %651 = vmatpush1.xpose.msra.mxu0 0.0
      %652 = vmatprep.subr.mxu0 0.0
      %653 = vmatpush1.xpose.msra.mxu0 0.0
      %654 = vmatprep.subr.mxu0 0.0
      %655 = vmatpush1.xpose.msra.mxu0 0.0
      %656 = vmatprep.subr.mxu0 0.0
      %657 = vmatpush1.xpose.msra.mxu0 0.0
      %658 = vmatprep.subr.mxu0 0.0
      %659 = vmatpush1.xpose.msra.mxu0 0.0
      %660 = vmatprep.subr.mxu0 0.0
      %661 = vmatpush1.xpose.msra.mxu0 0.0
      %662 = vmatprep.subr.mxu0 0.0
      %663 = vmatpush1.xpose.msra.mxu0 0.0
      %664 = vmatprep.subr.mxu0 0.0
      %665 = vmatpush1.xpose.msra.mxu0 0.0
      %666 = vmatprep.subr.mxu0 0.0
      %667 = vmatpush1.xpose.msra.mxu0 0.0
      %668 = vmatprep.mubr.f32.mxu0 0.0
      %669 = vmatmul.mubr.f32.gmra.mrb[0].mxu0 %v592
      %v670 = vpop.f32.mrb[0].mxu0
      %v671 = vadd.f32 %v383, %v670
      %v672 = vpop.f32.mrb[0].mxu0
      %673 = vmatprep.mubr.f32.mxu0 0.0
      %674 = vmatmul.mubr.f32.gmra.mrb[0].mxu0 %v594
      %v675 = vpop.f32.mrb[0].mxu0
      %v676 = vadd.f32 %v384, %v675
      %v677 = vpop.f32.mrb[0].mxu0
      %678 = vmatprep.mubr.f32.mxu0 0.0
      %679 = vmatmul.mubr.f32.gmra.mrb[0].mxu0 %v596
      %v680 = vpop.f32.mrb[0].mxu0
      %v681 = vadd.f32 %v385, %v680
      %v682 = vpop.f32.mrb[0].mxu0
      %683 = vdwg.mxu0
      %684 = vrot.lane.b32.xlu0 %v372, 96
      %v685 = vpop.permute.xlu0 %684
      %686 = vrot.lane.b32.xlu0 %v374, 96
      %v687 = vpop.permute.xlu0 %686
      %688 = vrot.lane.b32.xlu0 %v376, 96
      %v689 = vpop.permute.xlu0 %688
      %v690 = vsel %vm395, %v372, 0
      %v692 = vsel %vm395, %v374, 0
      %v694 = vsel %vm395, %v376, 0
      %v696 = vsel %vm395, %v685, 0
      %v698 = vsel %vm395, %v687, 0
      %v700 = vsel %vm395, %v689, 0
      %702 = vmatprep.subr.mxu0 0.0
      %703 = vmatpush1.xpose.msra.mxu0 %v696
      %704 = vmatprep.subr.mxu0 0.0
      %705 = vmatpush1.xpose.msra.mxu0 %v698
      %706 = vmatprep.subr.mxu0 0.0
      %707 = vmatpush1.xpose.msra.mxu0 %v700
      %708 = vmatprep.subr.mxu0 0.0
      %709 = vmatpush1.xpose.msra.mxu0 0.0
      %710 = vmatprep.subr.mxu0 0.0
      %711 = vmatpush1.xpose.msra.mxu0 0.0
      %712 = vmatprep.subr.mxu0 0.0
      %713 = vmatpush1.xpose.msra.mxu0 0.0
      %714 = vmatprep.subr.mxu0 0.0
      %715 = vmatpush1.xpose.msra.mxu0 0.0
      %716 = vmatprep.subr.mxu0 0.0
      %717 = vmatpush1.xpose.msra.mxu0 0.0
      %718 = vmatprep.subr.mxu0 0.0
      %719 = vmatpush1.xpose.msra.mxu0 0.0
      %720 = vmatprep.subr.mxu0 0.0
      %721 = vmatpush1.xpose.msra.mxu0 0.0
      %722 = vmatprep.subr.mxu0 0.0
      %723 = vmatpush1.xpose.msra.mxu0 0.0
      %724 = vmatprep.subr.mxu0 0.0
      %725 = vmatpush1.xpose.msra.mxu0 0.0
      %726 = vmatprep.subr.mxu0 0.0
      %727 = vmatpush1.xpose.msra.mxu0 0.0
      %728 = vmatprep.subr.mxu0 0.0
      %729 = vmatpush1.xpose.msra.mxu0 0.0
      %730 = vmatprep.subr.mxu0 0.0
      %731 = vmatpush1.xpose.msra.mxu0 0.0
      %732 = vmatprep.subr.mxu0 0.0
      %733 = vmatpush1.xpose.msra.mxu0 0.0
      %734 = vmatprep.subr.mxu0 0.0
      %735 = vmatpush1.xpose.msra.mxu0 0.0
      %736 = vmatprep.subr.mxu0 0.0
      %737 = vmatpush1.xpose.msra.mxu0 0.0
      %738 = vmatprep.subr.mxu0 0.0
      %739 = vmatpush1.xpose.msra.mxu0 0.0
      %740 = vmatprep.subr.mxu0 0.0
      %741 = vmatpush1.xpose.msra.mxu0 0.0
      %742 = vmatprep.subr.mxu0 0.0
      %743 = vmatpush1.xpose.msra.mxu0 0.0
      %744 = vmatprep.subr.mxu0 0.0
      %745 = vmatpush1.xpose.msra.mxu0 0.0
      %746 = vmatprep.subr.mxu0 0.0
      %747 = vmatpush1.xpose.msra.mxu0 0.0
      %748 = vmatprep.subr.mxu0 0.0
      %749 = vmatpush1.xpose.msra.mxu0 0.0
      %750 = vmatprep.subr.mxu0 0.0
      %751 = vmatpush1.xpose.msra.mxu0 0.0
      %752 = vmatprep.subr.mxu0 0.0
      %753 = vmatpush1.xpose.msra.mxu0 0.0
      %754 = vmatprep.subr.mxu0 0.0
      %755 = vmatpush1.xpose.msra.mxu0 0.0
      %756 = vmatprep.subr.mxu0 0.0
      %757 = vmatpush1.xpose.msra.mxu0 0.0
      %758 = vmatprep.subr.mxu0 0.0
      %759 = vmatpush1.xpose.msra.mxu0 0.0
      %760 = vmatprep.subr.mxu0 0.0
      %761 = vmatpush1.xpose.msra.mxu0 0.0
      %762 = vmatprep.subr.mxu0 0.0
      %763 = vmatpush1.xpose.msra.mxu0 0.0
      %764 = vmatprep.subr.mxu0 0.0
      %765 = vmatpush1.xpose.msra.mxu0 0.0
      %766 = vmatprep.mubr.f32.mxu0 0.0
      %767 = vmatmul.mubr.f32.gmra.mrb[0].mxu0 %v690
      %v768 = vpop.f32.mrb[0].mxu0
      %v769 = vadd.f32 %v386, %v768
      %v770 = vpop.f32.mrb[0].mxu0
      %771 = vmatprep.mubr.f32.mxu0 0.0
      %772 = vmatmul.mubr.f32.gmra.mrb[0].mxu0 %v692
      %v773 = vpop.f32.mrb[0].mxu0
      %v774 = vadd.f32 %v387, %v773
      %v775 = vpop.f32.mrb[0].mxu0
      %776 = vmatprep.mubr.f32.mxu0 0.0
      %777 = vmatmul.mubr.f32.gmra.mrb[0].mxu0 %v694
      %v778 = vpop.f32.mrb[0].mxu0
      %v779 = vadd.f32 %v388, %v778
      %v780 = vpop.f32.mrb[0].mxu0
      %781 = vdwg.mxu0
      %vm782 = vcmask 138240
      %v783 = vsel %vm782, %v475, -inf
      %784 = vmax.xlane.f32.xlu0 %v783
      %v785 = vpop.xlane.xlu0 %784
      %v786 = vsel %vm782, %v480, -inf
      %787 = vmax.xlane.f32.xlu0 %v786
      %v788 = vpop.xlane.xlu0 %787
      %vm789 = vcmask 131072
      %v790 = vsel %vm789, %v485, -inf
      %791 = vmax.xlane.f32.xlu0 %v790
      %v792 = vpop.xlane.xlu0 %791
      %v793 = vsel %vm782, %v573, -inf
      %794 = vmax.xlane.f32.xlu0 %v793
      %v795 = vpop.xlane.xlu0 %794
      %v796 = vsel %vm782, %v578, -inf
      %797 = vmax.xlane.f32.xlu0 %v796
      %v798 = vpop.xlane.xlu0 %797
      %v799 = vsel %vm789, %v583, -inf
      %800 = vmax.xlane.f32.xlu0 %v799
      %v801 = vpop.xlane.xlu0 %800
      %v802 = vsel %vm782, %v671, -inf
      %803 = vmax.xlane.f32.xlu0 %v802
      %v804 = vpop.xlane.xlu0 %803
      %v805 = vsel %vm782, %v676, -inf
      %806 = vmax.xlane.f32.xlu0 %v805
      %v807 = vpop.xlane.xlu0 %806
      %v808 = vsel %vm789, %v681, -inf
      %809 = vmax.xlane.f32.xlu0 %v808
      %v810 = vpop.xlane.xlu0 %809
      %v811 = vsel %vm782, %v769, -inf
      %812 = vmax.xlane.f32.xlu0 %v811
      %v813 = vpop.xlane.xlu0 %812
      %v814 = vsel %vm782, %v774, -inf
      %815 = vmax.xlane.f32.xlu0 %v814
      %v816 = vpop.xlane.xlu0 %815
      %v817 = vsel %vm789, %v779, -inf
      %818 = vmax.xlane.f32.xlu0 %v817
      %v819 = vpop.xlane.xlu0 %818
      %v820 = vsub.f32 %v475, %v785
      %v821 = vsub.f32 %v480, %v788
      %v822 = vsub.f32 %v485, %v792
      %v823 = vsub.f32 %v573, %v795
      %v824 = vsub.f32 %v578, %v798
      %v825 = vsub.f32 %v583, %v801
      %v826 = vsub.f32 %v671, %v804
      %v827 = vsub.f32 %v676, %v807
      %v828 = vsub.f32 %v681, %v810
      %v829 = vsub.f32 %v769, %v813
      %v830 = vsub.f32 %v774, %v816
      %v831 = vsub.f32 %v779, %v819
      %v832 = vmul.f32 %v820, 1.442695
      %v833 = vpow.pop %v832
      %v834 = vmul.f32 %v821, 1.442695
      %v835 = vpow.pop %v834
      %v836 = vmul.f32 %v822, 1.442695
      %v837 = vpow.pop %v836
      %v838 = vmul.f32 %v823, 1.442695
      %v839 = vpow.pop %v838
      %v840 = vmul.f32 %v824, 1.442695
      %v841 = vpow.pop %v840
      %v842 = vmul.f32 %v825, 1.442695
      %v843 = vpow.pop %v842
      %v844 = vmul.f32 %v826, 1.442695
      %v845 = vpow.pop %v844
      %v846 = vmul.f32 %v827, 1.442695
      %v847 = vpow.pop %v846
      %v848 = vmul.f32 %v828, 1.442695
      %v849 = vpow.pop %v848
      %v850 = vmul.f32 %v829, 1.442695
      %v851 = vpow.pop %v850
      %v852 = vmul.f32 %v830, 1.442695
      %v853 = vpow.pop %v852
      %v854 = vmul.f32 %v831, 1.442695
      %v855 = vpow.pop %v854
      %v856 = vsel %vm782, %v833, 0.0
      %857 = vadd.xlane.f32.xlu0 %v856
      %v858 = vpop.xlane.xlu0 %857
      %v859 = vsel %vm782, %v835, 0.0
      %860 = vadd.xlane.f32.xlu0 %v859
      %v861 = vpop.xlane.xlu0 %860
      %v862 = vsel %vm789, %v837, 0.0
      %863 = vadd.xlane.f32.xlu0 %v862
      %v864 = vpop.xlane.xlu0 %863
      %v865 = vsel %vm782, %v839, 0.0
      %866 = vadd.xlane.f32.xlu0 %v865
      %v867 = vpop.xlane.xlu0 %866
      %v868 = vsel %vm782, %v841, 0.0
      %869 = vadd.xlane.f32.xlu0 %v868
      %v870 = vpop.xlane.xlu0 %869
      %v871 = vsel %vm789, %v843, 0.0
      %872 = vadd.xlane.f32.xlu0 %v871
      %v873 = vpop.xlane.xlu0 %872
      %v874 = vsel %vm782, %v845, 0.0
      %875 = vadd.xlane.f32.xlu0 %v874
      %v876 = vpop.xlane.xlu0 %875
      %v877 = vsel %vm782, %v847, 0.0
      %878 = vadd.xlane.f32.xlu0 %v877
      %v879 = vpop.xlane.xlu0 %878
      %v880 = vsel %vm789, %v849, 0.0
      %881 = vadd.xlane.f32.xlu0 %v880
      %v882 = vpop.xlane.xlu0 %881
      %v883 = vsel %vm782, %v851, 0.0
      %884 = vadd.xlane.f32.xlu0 %v883
      %v885 = vpop.xlane.xlu0 %884
      %v886 = vsel %vm782, %v853, 0.0
      %887 = vadd.xlane.f32.xlu0 %v886
      %v888 = vpop.xlane.xlu0 %887
      %v889 = vsel %vm789, %v855, 0.0
      %890 = vadd.xlane.f32.xlu0 %v889
      %v891 = vpop.xlane.xlu0 %890
      %v892 = vrcp.pop %v858
      %v893 = vrcp.pop %v861
      %v894 = vrcp.pop %v864
      %v895 = vrcp.pop %v867
      %v896 = vrcp.pop %v870
      %v897 = vrcp.pop %v873
      %v898 = vrcp.pop %v876
      %v899 = vrcp.pop %v879
      %v900 = vrcp.pop %v882
      %v901 = vrcp.pop %v885
      %v902 = vrcp.pop %v888
      %v903 = vrcp.pop %v891
      %v904 = vmul.f32 %v858, %v892
      %v905 = vmul.f32 %v861, %v893
      %v906 = vmul.f32 %v864, %v894
      %v907 = vmul.f32 %v867, %v895
      %v908 = vmul.f32 %v870, %v896
      %v909 = vmul.f32 %v873, %v897
      %v910 = vmul.f32 %v876, %v898
      %v911 = vmul.f32 %v879, %v899
      %v912 = vmul.f32 %v882, %v900
      %v913 = vmul.f32 %v885, %v901
      %v914 = vmul.f32 %v888, %v902
      %v915 = vmul.f32 %v891, %v903
      %v916 = vsub.f32 2.0, %v904
      %v917 = vsub.f32 2.0, %v905
      %v918 = vsub.f32 2.0, %v906
      %v919 = vsub.f32 2.0, %v907
      %v920 = vsub.f32 2.0, %v908
      %v921 = vsub.f32 2.0, %v909
      %v922 = vsub.f32 2.0, %v910
      %v923 = vsub.f32 2.0, %v911
      %v924 = vsub.f32 2.0, %v912
      %v925 = vsub.f32 2.0, %v913
      %v926 = vsub.f32 2.0, %v914
      %v927 = vsub.f32 2.0, %v915
      %v928 = vmul.f32 %v892, %v916
      %v929 = vmul.f32 %v893, %v917
      %v930 = vmul.f32 %v894, %v918
      %v931 = vmul.f32 %v895, %v919
      %v932 = vmul.f32 %v896, %v920
      %v933 = vmul.f32 %v897, %v921
      %v934 = vmul.f32 %v898, %v922
      %v935 = vmul.f32 %v899, %v923
      %v936 = vmul.f32 %v900, %v924
      %v937 = vmul.f32 %v901, %v925
      %v938 = vmul.f32 %v902, %v926
      %v939 = vmul.f32 %v903, %v927
      %940 = vrot.lane.b32.xlu0 %v343, 64
      %v941 = vpop.permute.xlu0 %940
      %942 = vrot.lane.b32.xlu0 %v348, 64
      %v943 = vpop.permute.xlu0 %942
      %944 = vrot.lane.b32.xlu0 %v353, 64
      %v945 = vpop.permute.xlu0 %944
      %v949 = vsel %vm782, %v833, 0
      %v952 = vsel %vm782, %v835, 0
      %v955 = vsel %vm782, %v837, 0
      %vm957 = vcmask 1040384
      %v958 = vsel %vm957, %v945, 0
      %960 = vmatprep.subr.mxu0 0.0
      %961 = vmatpush1.msra.mxu0 %v941
      %962 = vmatprep.subr.mxu0 0.0
      %963 = vmatpush1.msra.mxu0 %v943
      %964 = vmatprep.subr.mxu0 0.0
      %965 = vmatpush1.msra.mxu0 %v958
      %966 = vmatprep.subr.mxu0 0.0
      %967 = vmatpush1.msra.mxu0 0.0
      %968 = vmatprep.subr.mxu0 0.0
      %969 = vmatpush1.msra.mxu0 0.0
      %970 = vmatprep.subr.mxu0 0.0
      %971 = vmatpush1.msra.mxu0 0.0
      %972 = vmatprep.subr.mxu0 0.0
      %973 = vmatpush1.msra.mxu0 0.0
      %974 = vmatprep.subr.mxu0 0.0
      %975 = vmatpush1.msra.mxu0 0.0
      %976 = vmatprep.subr.mxu0 0.0
      %977 = vmatpush1.msra.mxu0 0.0
      %978 = vmatprep.subr.mxu0 0.0
      %979 = vmatpush1.msra.mxu0 0.0
      %980 = vmatprep.subr.mxu0 0.0
      %981 = vmatpush1.msra.mxu0 0.0
      %982 = vmatprep.subr.mxu0 0.0
      %983 = vmatpush1.msra.mxu0 0.0
      %984 = vmatprep.subr.mxu0 0.0
      %985 = vmatpush1.msra.mxu0 0.0
      %986 = vmatprep.subr.mxu0 0.0
      %987 = vmatpush1.msra.mxu0 0.0
      %988 = vmatprep.subr.mxu0 0.0
      %989 = vmatpush1.msra.mxu0 0.0
      %990 = vmatprep.subr.mxu0 0.0
      %991 = vmatpush1.msra.mxu0 0.0
      %992 = vmatprep.subr.mxu0 0.0
      %993 = vmatpush1.msra.mxu0 0.0
      %994 = vmatprep.subr.mxu0 0.0
      %995 = vmatpush1.msra.mxu0 0.0
      %996 = vmatprep.subr.mxu0 0.0
      %997 = vmatpush1.msra.mxu0 0.0
      %998 = vmatprep.subr.mxu0 0.0
      %999 = vmatpush1.msra.mxu0 0.0
      %1000 = vmatprep.subr.mxu0 0.0
      %1001 = vmatpush1.msra.mxu0 0.0
      %1002 = vmatprep.subr.mxu0 0.0
      %1003 = vmatpush1.msra.mxu0 0.0
      %1004 = vmatprep.subr.mxu0 0.0
      %1005 = vmatpush1.msra.mxu0 0.0
      %1006 = vmatprep.subr.mxu0 0.0
      %1007 = vmatpush1.msra.mxu0 0.0
      %1008 = vmatprep.subr.mxu0 0.0
      %1009 = vmatpush1.msra.mxu0 0.0
      %1010 = vmatprep.subr.mxu0 0.0
      %1011 = vmatpush1.msra.mxu0 0.0
      %1012 = vmatprep.subr.mxu0 0.0
      %1013 = vmatpush1.msra.mxu0 0.0
      %1014 = vmatprep.subr.mxu0 0.0
      %1015 = vmatpush1.msra.mxu0 0.0
      %1016 = vmatprep.subr.mxu0 0.0
      %1017 = vmatpush1.msra.mxu0 0.0
      %1018 = vmatprep.subr.mxu0 0.0
      %1019 = vmatpush1.msra.mxu0 0.0
      %1020 = vmatprep.subr.mxu0 0.0
      %1021 = vmatpush1.msra.mxu0 0.0
      %1022 = vmatprep.subr.mxu0 0.0
      %1023 = vmatpush1.msra.mxu0 0.0
      %1024 = vmatprep.mubr.f32.mxu0 0.0
      %1025 = vmatmul.mubr.f32.gmra.mrb[0].mxu0 %v949
      %v1026 = vpop.f32.mrb[0].mxu0
      %v1027 = vadd.f32 0.0, %v1026
      %v1028 = vpop.f32.mrb[0].mxu0
      %1029 = vmatprep.mubr.f32.mxu0 0.0
      %1030 = vmatmul.mubr.f32.gmra.mrb[0].mxu0 %v952
      %v1031 = vpop.f32.mrb[0].mxu0
      %v1032 = vadd.f32 0.0, %v1031
      %v1033 = vpop.f32.mrb[0].mxu0
      %1034 = vmatprep.mubr.f32.mxu0 0.0
      %1035 = vmatmul.mubr.f32.gmra.mrb[0].mxu0 %v955
      %v1036 = vpop.f32.mrb[0].mxu0
      %v1037 = vadd.f32 0.0, %v1036
      %v1038 = vpop.f32.mrb[0].mxu0
      %1039 = vdwg.mxu0
      %1040 = vrot.lane.b32.xlu0 %v360, 64
      %v1041 = vpop.permute.xlu0 %1040
      %1042 = vrot.lane.b32.xlu0 %v362, 64
      %v1043 = vpop.permute.xlu0 %1042
      %1044 = vrot.lane.b32.xlu0 %v364, 64
      %v1045 = vpop.permute.xlu0 %1044
      %v1049 = vsel %vm782, %v839, 0
      %v1052 = vsel %vm782, %v841, 0
      %v1055 = vsel %vm782, %v843, 0
      %v1057 = vsel %vm957, %v1045, 0
      %1059 = vmatprep.subr.mxu0 0.0
      %1060 = vmatpush1.msra.mxu0 %v1041
      %1061 = vmatprep.subr.mxu0 0.0
      %1062 = vmatpush1.msra.mxu0 %v1043
      %1063 = vmatprep.subr.mxu0 0.0
      %1064 = vmatpush1.msra.mxu0 %v1057
      %1065 = vmatprep.subr.mxu0 0.0
      %1066 = vmatpush1.msra.mxu0 0.0
      %1067 = vmatprep.subr.mxu0 0.0
      %1068 = vmatpush1.msra.mxu0 0.0
      %1069 = vmatprep.subr.mxu0 0.0
      %1070 = vmatpush1.msra.mxu0 0.0
      %1071 = vmatprep.subr.mxu0 0.0
      %1072 = vmatpush1.msra.mxu0 0.0
      %1073 = vmatprep.subr.mxu0 0.0
      %1074 = vmatpush1.msra.mxu0 0.0
      %1075 = vmatprep.subr.mxu0 0.0
      %1076 = vmatpush1.msra.mxu0 0.0
      %1077 = vmatprep.subr.mxu0 0.0
      %1078 = vmatpush1.msra.mxu0 0.0
      %1079 = vmatprep.subr.mxu0 0.0
      %1080 = vmatpush1.msra.mxu0 0.0
      %1081 = vmatprep.subr.mxu0 0.0
      %1082 = vmatpush1.msra.mxu0 0.0
      %1083 = vmatprep.subr.mxu0 0.0
      %1084 = vmatpush1.msra.mxu0 0.0
      %1085 = vmatprep.subr.mxu0 0.0
      %1086 = vmatpush1.msra.mxu0 0.0
      %1087 = vmatprep.subr.mxu0 0.0
      %1088 = vmatpush1.msra.mxu0 0.0
      %1089 = vmatprep.subr.mxu0 0.0
      %1090 = vmatpush1.msra.mxu0 0.0
      %1091 = vmatprep.subr.mxu0 0.0
      %1092 = vmatpush1.msra.mxu0 0.0
      %1093 = vmatprep.subr.mxu0 0.0
      %1094 = vmatpush1.msra.mxu0 0.0
      %1095 = vmatprep.subr.mxu0 0.0
      %1096 = vmatpush1.msra.mxu0 0.0
      %1097 = vmatprep.subr.mxu0 0.0
      %1098 = vmatpush1.msra.mxu0 0.0
      %1099 = vmatprep.subr.mxu0 0.0
      %1100 = vmatpush1.msra.mxu0 0.0
      %1101 = vmatprep.subr.mxu0 0.0
      %1102 = vmatpush1.msra.mxu0 0.0
      %1103 = vmatprep.subr.mxu0 0.0
      %1104 = vmatpush1.msra.mxu0 0.0
      %1105 = vmatprep.subr.mxu0 0.0
      %1106 = vmatpush1.msra.mxu0 0.0
      %1107 = vmatprep.subr.mxu0 0.0
      %1108 = vmatpush1.msra.mxu0 0.0
      %1109 = vmatprep.subr.mxu0 0.0
      %1110 = vmatpush1.msra.mxu0 0.0
      %1111 = vmatprep.subr.mxu0 0.0
      %1112 = vmatpush1.msra.mxu0 0.0
      %1113 = vmatprep.subr.mxu0 0.0
      %1114 = vmatpush1.msra.mxu0 0.0
      %1115 = vmatprep.subr.mxu0 0.0
      %1116 = vmatpush1.msra.mxu0 0.0
      %1117 = vmatprep.subr.mxu0 0.0
      %1118 = vmatpush1.msra.mxu0 0.0
      %1119 = vmatprep.subr.mxu0 0.0
      %1120 = vmatpush1.msra.mxu0 0.0
      %1121 = vmatprep.subr.mxu0 0.0
      %1122 = vmatpush1.msra.mxu0 0.0
      %1123 = vmatprep.mubr.f32.mxu0 0.0
      %1124 = vmatmul.mubr.f32.gmra.mrb[0].mxu0 %v1049
      %v1125 = vpop.f32.mrb[0].mxu0
      %v1126 = vadd.f32 0.0, %v1125
      %v1127 = vpop.f32.mrb[0].mxu0
      %1128 = vmatprep.mubr.f32.mxu0 0.0
      %1129 = vmatmul.mubr.f32.gmra.mrb[0].mxu0 %v1052
      %v1130 = vpop.f32.mrb[0].mxu0
      %v1131 = vadd.f32 0.0, %v1130
      %v1132 = vpop.f32.mrb[0].mxu0
      %1133 = vmatprep.mubr.f32.mxu0 0.0
      %1134 = vmatmul.mubr.f32.gmra.mrb[0].mxu0 %v1055
      %v1135 = vpop.f32.mrb[0].mxu0
      %v1136 = vadd.f32 0.0, %v1135
      %v1137 = vpop.f32.mrb[0].mxu0
      %1138 = vdwg.mxu0
      %1139 = vrot.lane.b32.xlu0 %v366, 64
      %v1140 = vpop.permute.xlu0 %1139
      %1141 = vrot.lane.b32.xlu0 %v368, 64
      %v1142 = vpop.permute.xlu0 %1141
      %1143 = vrot.lane.b32.xlu0 %v370, 64
      %v1144 = vpop.permute.xlu0 %1143
      %v1148 = vsel %vm782, %v845, 0
      %v1151 = vsel %vm782, %v847, 0
      %v1154 = vsel %vm782, %v849, 0
      %v1156 = vsel %vm957, %v1144, 0
      %1158 = vmatprep.subr.mxu0 0.0
      %1159 = vmatpush1.msra.mxu0 %v1140
      %1160 = vmatprep.subr.mxu0 0.0
      %1161 = vmatpush1.msra.mxu0 %v1142
      %1162 = vmatprep.subr.mxu0 0.0
      %1163 = vmatpush1.msra.mxu0 %v1156
      %1164 = vmatprep.subr.mxu0 0.0
      %1165 = vmatpush1.msra.mxu0 0.0
      %1166 = vmatprep.subr.mxu0 0.0
      %1167 = vmatpush1.msra.mxu0 0.0
      %1168 = vmatprep.subr.mxu0 0.0
      %1169 = vmatpush1.msra.mxu0 0.0
      %1170 = vmatprep.subr.mxu0 0.0
      %1171 = vmatpush1.msra.mxu0 0.0
      %1172 = vmatprep.subr.mxu0 0.0
      %1173 = vmatpush1.msra.mxu0 0.0
      %1174 = vmatprep.subr.mxu0 0.0
      %1175 = vmatpush1.msra.mxu0 0.0
      %1176 = vmatprep.subr.mxu0 0.0
      %1177 = vmatpush1.msra.mxu0 0.0
      %1178 = vmatprep.subr.mxu0 0.0
      %1179 = vmatpush1.msra.mxu0 0.0
      %1180 = vmatprep.subr.mxu0 0.0
      %1181 = vmatpush1.msra.mxu0 0.0
      %1182 = vmatprep.subr.mxu0 0.0
      %1183 = vmatpush1.msra.mxu0 0.0
      %1184 = vmatprep.subr.mxu0 0.0
      %1185 = vmatpush1.msra.mxu0 0.0
      %1186 = vmatprep.subr.mxu0 0.0
      %1187 = vmatpush1.msra.mxu0 0.0
      %1188 = vmatprep.subr.mxu0 0.0
      %1189 = vmatpush1.msra.mxu0 0.0
      %1190 = vmatprep.subr.mxu0 0.0
      %1191 = vmatpush1.msra.mxu0 0.0
      %1192 = vmatprep.subr.mxu0 0.0
      %1193 = vmatpush1.msra.mxu0 0.0
      %1194 = vmatprep.subr.mxu0 0.0
      %1195 = vmatpush1.msra.mxu0 0.0
      %1196 = vmatprep.subr.mxu0 0.0
      %1197 = vmatpush1.msra.mxu0 0.0
      %1198 = vmatprep.subr.mxu0 0.0
      %1199 = vmatpush1.msra.mxu0 0.0
      %1200 = vmatprep.subr.mxu0 0.0
      %1201 = vmatpush1.msra.mxu0 0.0
      %1202 = vmatprep.subr.mxu0 0.0
      %1203 = vmatpush1.msra.mxu0 0.0
      %1204 = vmatprep.subr.mxu0 0.0
      %1205 = vmatpush1.msra.mxu0 0.0
      %1206 = vmatprep.subr.mxu0 0.0
      %1207 = vmatpush1.msra.mxu0 0.0
      %1208 = vmatprep.subr.mxu0 0.0
      %1209 = vmatpush1.msra.mxu0 0.0
      %1210 = vmatprep.subr.mxu0 0.0
      %1211 = vmatpush1.msra.mxu0 0.0
      %1212 = vmatprep.subr.mxu0 0.0
      %1213 = vmatpush1.msra.mxu0 0.0
      %1214 = vmatprep.subr.mxu0 0.0
      %1215 = vmatpush1.msra.mxu0 0.0
      %1216 = vmatprep.subr.mxu0 0.0
      %1217 = vmatpush1.msra.mxu0 0.0
      %1218 = vmatprep.subr.mxu0 0.0
      %1219 = vmatpush1.msra.mxu0 0.0
      %1220 = vmatprep.subr.mxu0 0.0
      %1221 = vmatpush1.msra.mxu0 0.0
      %1222 = vmatprep.mubr.f32.mxu0 0.0
      %1223 = vmatmul.mubr.f32.gmra.mrb[0].mxu0 %v1148
      %v1224 = vpop.f32.mrb[0].mxu0
      %v1225 = vadd.f32 0.0, %v1224
      %v1226 = vpop.f32.mrb[0].mxu0
      %1227 = vmatprep.mubr.f32.mxu0 0.0
      %1228 = vmatmul.mubr.f32.gmra.mrb[0].mxu0 %v1151
      %v1229 = vpop.f32.mrb[0].mxu0
      %v1230 = vadd.f32 0.0, %v1229
      %v1231 = vpop.f32.mrb[0].mxu0
      %1232 = vmatprep.mubr.f32.mxu0 0.0
      %1233 = vmatmul.mubr.f32.gmra.mrb[0].mxu0 %v1154
      %v1234 = vpop.f32.mrb[0].mxu0
      %v1235 = vadd.f32 0.0, %v1234
      %v1236 = vpop.f32.mrb[0].mxu0
      %1237 = vdwg.mxu0
      %1238 = vrot.lane.b32.xlu0 %v372, 64
      %v1239 = vpop.permute.xlu0 %1238
      %1240 = vrot.lane.b32.xlu0 %v374, 64
      %v1241 = vpop.permute.xlu0 %1240
      %1242 = vrot.lane.b32.xlu0 %v376, 64
      %v1243 = vpop.permute.xlu0 %1242
      %v1247 = vsel %vm782, %v851, 0
      %v1250 = vsel %vm782, %v853, 0
      %v1253 = vsel %vm782, %v855, 0
      %v1255 = vsel %vm957, %v1243, 0
      %1257 = vmatprep.subr.mxu0 0.0
      %1258 = vmatpush1.msra.mxu0 %v1239
      %1259 = vmatprep.subr.mxu0 0.0
      %1260 = vmatpush1.msra.mxu0 %v1241
      %1261 = vmatprep.subr.mxu0 0.0
      %1262 = vmatpush1.msra.mxu0 %v1255
      %1263 = vmatprep.subr.mxu0 0.0
      %1264 = vmatpush1.msra.mxu0 0.0
      %1265 = vmatprep.subr.mxu0 0.0
      %1266 = vmatpush1.msra.mxu0 0.0
      %1267 = vmatprep.subr.mxu0 0.0
      %1268 = vmatpush1.msra.mxu0 0.0
      %1269 = vmatprep.subr.mxu0 0.0
      %1270 = vmatpush1.msra.mxu0 0.0
      %1271 = vmatprep.subr.mxu0 0.0
      %1272 = vmatpush1.msra.mxu0 0.0
      %1273 = vmatprep.subr.mxu0 0.0
      %1274 = vmatpush1.msra.mxu0 0.0
      %1275 = vmatprep.subr.mxu0 0.0
      %1276 = vmatpush1.msra.mxu0 0.0
      %1277 = vmatprep.subr.mxu0 0.0
      %1278 = vmatpush1.msra.mxu0 0.0
      %1279 = vmatprep.subr.mxu0 0.0
      %1280 = vmatpush1.msra.mxu0 0.0
      %1281 = vmatprep.subr.mxu0 0.0
      %1282 = vmatpush1.msra.mxu0 0.0
      %1283 = vmatprep.subr.mxu0 0.0
      %1284 = vmatpush1.msra.mxu0 0.0
      %1285 = vmatprep.subr.mxu0 0.0
      %1286 = vmatpush1.msra.mxu0 0.0
      %1287 = vmatprep.subr.mxu0 0.0
      %1288 = vmatpush1.msra.mxu0 0.0
      %1289 = vmatprep.subr.mxu0 0.0
      %1290 = vmatpush1.msra.mxu0 0.0
      %1291 = vmatprep.subr.mxu0 0.0
      %1292 = vmatpush1.msra.mxu0 0.0
      %1293 = vmatprep.subr.mxu0 0.0
      %1294 = vmatpush1.msra.mxu0 0.0
      %1295 = vmatprep.subr.mxu0 0.0
      %1296 = vmatpush1.msra.mxu0 0.0
      %1297 = vmatprep.subr.mxu0 0.0
      %1298 = vmatpush1.msra.mxu0 0.0
      %1299 = vmatprep.subr.mxu0 0.0
      %1300 = vmatpush1.msra.mxu0 0.0
      %1301 = vmatprep.subr.mxu0 0.0
      %1302 = vmatpush1.msra.mxu0 0.0
      %1303 = vmatprep.subr.mxu0 0.0
      %1304 = vmatpush1.msra.mxu0 0.0
      %1305 = vmatprep.subr.mxu0 0.0
      %1306 = vmatpush1.msra.mxu0 0.0
      %1307 = vmatprep.subr.mxu0 0.0
      %1308 = vmatpush1.msra.mxu0 0.0
      %1309 = vmatprep.subr.mxu0 0.0
      %1310 = vmatpush1.msra.mxu0 0.0
      %1311 = vmatprep.subr.mxu0 0.0
      %1312 = vmatpush1.msra.mxu0 0.0
      %1313 = vmatprep.subr.mxu0 0.0
      %1314 = vmatpush1.msra.mxu0 0.0
      %1315 = vmatprep.subr.mxu0 0.0
      %1316 = vmatpush1.msra.mxu0 0.0
      %1317 = vmatprep.subr.mxu0 0.0
      %1318 = vmatpush1.msra.mxu0 0.0
      %1319 = vmatprep.subr.mxu0 0.0
      %1320 = vmatpush1.msra.mxu0 0.0
      %1321 = vmatprep.mubr.f32.mxu0 0.0
      %1322 = vmatmul.mubr.f32.gmra.mrb[0].mxu0 %v1247
      %v1323 = vpop.f32.mrb[0].mxu0
      %v1324 = vadd.f32 0.0, %v1323
      %v1325 = vpop.f32.mrb[0].mxu0
      %1326 = vmatprep.mubr.f32.mxu0 0.0
      %1327 = vmatmul.mubr.f32.gmra.mrb[0].mxu0 %v1250
      %v1328 = vpop.f32.mrb[0].mxu0
      %v1329 = vadd.f32 0.0, %v1328
      %v1330 = vpop.f32.mrb[0].mxu0
      %1331 = vmatprep.mubr.f32.mxu0 0.0
      %1332 = vmatmul.mubr.f32.gmra.mrb[0].mxu0 %v1253
      %v1333 = vpop.f32.mrb[0].mxu0
      %v1334 = vadd.f32 0.0, %v1333
      %v1335 = vpop.f32.mrb[0].mxu0
      %1336 = vdwg.mxu0
      %v1337 = vmul.f32 %v1027, %v928
      %v1338 = vmul.f32 %v1032, %v929
      %v1339 = vmul.f32 %v1037, %v930
      %v1340 = vmul.f32 %v1126, %v931
      %v1341 = vmul.f32 %v1131, %v932
      %v1342 = vmul.f32 %v1136, %v933
      %v1343 = vmul.f32 %v1225, %v934
      %v1344 = vmul.f32 %v1230, %v935
      %v1345 = vmul.f32 %v1235, %v936
      %v1346 = vmul.f32 %v1324, %v937
      %v1347 = vmul.f32 %v1329, %v938
      %v1348 = vmul.f32 %v1334, %v939
      %1352 = vrot.lane.b32.xlu0 %v1340, 8
      %v1353 = vpop.permute.xlu0 %1352
      %1354 = vrot.lane.b32.xlu0 %v1341, 8
      %v1355 = vpop.permute.xlu0 %1354
      %1356 = vrot.lane.b32.xlu0 %v1342, 8
      %v1357 = vpop.permute.xlu0 %1356
      %1364 = vrot.lane.b32.xlu0 %v1343, 16
      %v1365 = vpop.permute.xlu0 %1364
      %1366 = vrot.lane.b32.xlu0 %v1344, 16
      %v1367 = vpop.permute.xlu0 %1366
      %1368 = vrot.lane.b32.xlu0 %v1345, 16
      %v1369 = vpop.permute.xlu0 %1368
      %1376 = vrot.lane.b32.xlu0 %v1346, 24
      %v1377 = vpop.permute.xlu0 %1376
      %1378 = vrot.lane.b32.xlu0 %v1347, 24
      %v1379 = vpop.permute.xlu0 %1378
      %1380 = vrot.lane.b32.xlu0 %v1348, 24
      %v1381 = vpop.permute.xlu0 %1380
      %v1385 = vsel %vm395, %v1337, %v1353
      %v1386 = vsel %vm395, %v1338, %v1355
      %v1387 = vsel %vm395, %v1339, %v1357
      %vm1388 = vcmask 130048
      %v1389 = vsel %vm1388, %v1385, %v1365
      %v1390 = vsel %vm1388, %v1386, %v1367
      %v1391 = vsel %vm1388, %v1387, %v1369
      %vm1392 = vcmask 195584
      %v1393 = vsel %vm1392, %v1389, %v1377
      %v1394 = vsel %vm1392, %v1390, %v1379
      %v1395 = vsel %vm1392, %v1391, %v1381
      %v1396 = vld [vmem:[%s4] sm:$0xff]
      %v1397 = vld [vmem:[%s4 + $0x8] sm:$0xff]
      %v1398 = vld [vmem:[%s4 + $0x10] sm:$0xff]
      %v1399 = vld [vmem:[%s4 + $0x18] sm:$0xff]
      %v1400 = vld [vmem:[%s5] sm:$0x1]
      %v1402 = vlaneseq
      %v1403 = vshrl.u32 %v1402, 7
      %v1404 = vsub.s32 0, %v1403
      %v1405 = vrot.slane %v1400, %v1404
      %v1408 = vsel %vm266, %v1393, 0
      %v1411 = vsel %vm266, %v1394, 0
      %v1414 = vsel %vm266, %v1395, 0
      %1416 = vmatprep.subr.mxu0 0.0
      %1417 = vmatpush1.msra.mxu0 %v1396
      %1418 = vmatprep.subr.mxu0 0.0
      %1419 = vmatpush1.msra.mxu0 %v1397
      %1420 = vmatprep.subr.mxu0 0.0
      %1421 = vmatpush1.msra.mxu0 %v1398
      %1422 = vmatprep.subr.mxu0 0.0
      %1423 = vmatpush1.msra.mxu0 %v1399
      %1424 = vmatprep.subr.mxu0 0.0
      %1425 = vmatpush1.msra.mxu0 0.0
      %1426 = vmatprep.subr.mxu0 0.0
      %1427 = vmatpush1.msra.mxu0 0.0
      %1428 = vmatprep.subr.mxu0 0.0
      %1429 = vmatpush1.msra.mxu0 0.0
      %1430 = vmatprep.subr.mxu0 0.0
      %1431 = vmatpush1.msra.mxu0 0.0
      %1432 = vmatprep.subr.mxu0 0.0
      %1433 = vmatpush1.msra.mxu0 0.0
      %1434 = vmatprep.subr.mxu0 0.0
      %1435 = vmatpush1.msra.mxu0 0.0
      %1436 = vmatprep.subr.mxu0 0.0
      %1437 = vmatpush1.msra.mxu0 0.0
      %1438 = vmatprep.subr.mxu0 0.0
      %1439 = vmatpush1.msra.mxu0 0.0
      %1440 = vmatprep.subr.mxu0 0.0
      %1441 = vmatpush1.msra.mxu0 0.0
      %1442 = vmatprep.subr.mxu0 0.0
      %1443 = vmatpush1.msra.mxu0 0.0
      %1444 = vmatprep.subr.mxu0 0.0
      %1445 = vmatpush1.msra.mxu0 0.0
      %1446 = vmatprep.subr.mxu0 0.0
      %1447 = vmatpush1.msra.mxu0 0.0
      %1448 = vmatprep.subr.mxu0 0.0
      %1449 = vmatpush1.msra.mxu0 0.0
      %1450 = vmatprep.subr.mxu0 0.0
      %1451 = vmatpush1.msra.mxu0 0.0
      %1452 = vmatprep.subr.mxu0 0.0
      %1453 = vmatpush1.msra.mxu0 0.0
      %1454 = vmatprep.subr.mxu0 0.0
      %1455 = vmatpush1.msra.mxu0 0.0
      %1456 = vmatprep.subr.mxu0 0.0
      %1457 = vmatpush1.msra.mxu0 0.0
      %1458 = vmatprep.subr.mxu0 0.0
      %1459 = vmatpush1.msra.mxu0 0.0
      %1460 = vmatprep.subr.mxu0 0.0
      %1461 = vmatpush1.msra.mxu0 0.0
      %1462 = vmatprep.subr.mxu0 0.0
      %1463 = vmatpush1.msra.mxu0 0.0
      %1464 = vmatprep.subr.mxu0 0.0
      %1465 = vmatpush1.msra.mxu0 0.0
      %1466 = vmatprep.subr.mxu0 0.0
      %1467 = vmatpush1.msra.mxu0 0.0
      %1468 = vmatprep.subr.mxu0 0.0
      %1469 = vmatpush1.msra.mxu0 0.0
      %1470 = vmatprep.subr.mxu0 0.0
      %1471 = vmatpush1.msra.mxu0 0.0
      %1472 = vmatprep.subr.mxu0 0.0
      %1473 = vmatpush1.msra.mxu0 0.0
      %1474 = vmatprep.subr.mxu0 0.0
      %1475 = vmatpush1.msra.mxu0 0.0
      %1476 = vmatprep.subr.mxu0 0.0
      %1477 = vmatpush1.msra.mxu0 0.0
      %1478 = vmatprep.subr.mxu0 0.0
      %1479 = vmatpush1.msra.mxu0 0.0
      %1480 = vmatprep.mubr.f32.mxu0 0.0
      %1481 = vmatmul.mubr.f32.gmra.mrb[0].mxu0 %v1408
      %v1482 = vpop.f32.mrb[0].mxu0
      %v1483 = vadd.f32 %v1405, %v1482
      %v1484 = vpop.f32.mrb[0].mxu0
      %1485 = vmatprep.mubr.f32.mxu0 0.0
      %1486 = vmatmul.mubr.f32.gmra.mrb[0].mxu0 %v1411
      %v1487 = vpop.f32.mrb[0].mxu0
      %v1488 = vadd.f32 %v1405, %v1487
      %v1489 = vpop.f32.mrb[0].mxu0
      %1490 = vmatprep.mubr.f32.mxu0 0.0
      %1491 = vmatmul.mubr.f32.gmra.mrb[0].mxu0 %v1414
      %v1492 = vpop.f32.mrb[0].mxu0
      %v1493 = vadd.f32 %v1405, %v1492
      %v1494 = vpop.f32.mrb[0].mxu0
      %1495 = vdwg.mxu0
      %1496 = vst.msk [vmem:[%s251] sm:$0xff] %vm266, %v1483
      %1497 = vst.msk [vmem:[%s251 + $0x8] sm:$0xff] %vm266, %v1488
      %vm1498 = vcmask 253952
      %1499 = vst.msk [vmem:[%s251 + $0x10] sm:$0x1] %vm1498, %v1493
      %p1500 = scmp.lt.s32.totalorder %s17, 1
      %s1501 = scalar_select %p1500, %s17, 1
      %s1502 = smul.addr %s1501, 3
      %s1503 = smul.addr %s1502, 8
      %s1504 = scalar_lea.vmem %s6, %s1503
      // Predicated region
      $region45: #{tpu_custom_call.1} parent=43 // pred_check
        %p1505 = pneg %p166
      $region46: #{tpu_custom_call.1} parent=43 // pred_check_branch
        %1507 = sbr.rel (%p1505) target = $region48
      $region47: #{tpu_custom_call.1} parent=43 // pred_region
        _
      $region48: #{tpu_custom_call.1} parent=43 // pred_fallthru
        _
    $region44: #{tpu_custom_call.1} parent=5 // pred_fallthru
      _
    %p1508 = scmp.le.s32.totalorder 2, %s12
    // Predicated region
    $region49: #{tpu_custom_call.1} parent=5 // pred_check
      %p1509 = pneg %p1508
    $region50: #{tpu_custom_call.1} parent=5 // pred_check_branch
      %1511 = sbr.rel (%p1509) target = $region52
    $region51: #{tpu_custom_call.1} parent=5 // pred_region
      %s1512 = ssub.s32 %s12, 2
      // Predicated region
      $region53: #{tpu_custom_call.1} parent=51 // pred_check
        %p1513 = pneg %p172
      $region54: #{tpu_custom_call.1} parent=51 // pred_check_branch
        %1515 = sbr.rel (%p1513) target = $region56
      $region55: #{tpu_custom_call.1} parent=51 // pred_region
        %p1516 = scmp.lt.s32.totalorder %s18, 1
        %s1517 = scalar_select %p1516, %s18, 1
        %s1518 = smul.addr %s1517, 3
        %s1519 = smul.addr %s1518, 8
        %s1520 = scalar_lea.vmem %s6, %s1519
      $region56: #{tpu_custom_call.1} parent=51 // pred_fallthru
        _
    $region52: #{tpu_custom_call.1} parent=5 // pred_fallthru
      _
  $region6: #{tpu_custom_call.1} parent=0 // loop_footer
    %s16 = sadd.s32 1, %s12
  $region7: #{tpu_custom_call.1} parent=0 // loop_footer_branch
    %11 = sbr.rel target = $region3
  $region8: #{tpu_custom_call.1} parent=0 // loop_exit
    _

</llo_original>
